<compile_context>
chip_gen: v6e
topology: v6e:2x2x1
jax: 0.10.0
libtpu: 0.0.40
codegen_flags: <defaults>
</compile_context>

<pallas_src>
import functools

import jax
import jax.numpy as jnp
from jax.experimental import pallas as pl
from jax.experimental.pallas import tpu as pltpu


def _round_up(x, m):
    return (x + m - 1) // m * m


def _pick_row_tile(ho, wo, m_target=512):
    """Largest divisor `th` of `ho` with th*wo <= m_target (falls back to 1)."""
    best = 1
    for th in range(1, ho + 1):
        if ho % th == 0 and th * wo <= m_target:
            best = th
    return best


def _device_kind():
    try:
        return jax.devices()[0].device_kind.lower()
    except Exception:  # pragma: no cover - defensive, e.g. no devices visible
        return ""


def _conv2d_kernel(x_ref, w_ref, b_ref, o_ref, *, kh_kw, stride, dilation,
                   row_tile, fold_taps):
    # x_ref: (1, Hp, Wp, C)      padded NHWC input, whole image for one batch n
    # w_ref: (KH*KW*C, TO)       im2col-flattened weight slab (O tile, lane-dense)
    # b_ref: (1, TO)             f32 bias (padded O)
    # o_ref: (1, TH, Wo, TO)     output row/O tile (lane-dense O)
    KH, KW = kh_kw
    sh, sw = stride
    dh, dw = dilation
    th = row_tile
    C = x_ref.shape[-1]
    Wo = o_ref.shape[2]
    TO = o_ref.shape[3]

    i = pl.program_id(2)                                  # row-tile index (innermost)
    row0 = pl.multiple_of(i * (th * sh), th * sh)         # top padded-input row

    compute_dtype = w_ref.dtype                           # MXU operand dtype

    def tap_patch(kh, kw):
        h_sl = pl.ds(row0 + kh * dh, th, stride=sh if sh > 1 else None)
        # TODO(synk): for sw > 1, prefer a contiguous load + in-vreg stride
        #             selection; strided loads on the W axis hit the (8,128)
        #             tiling directly and are slow on all generations.
        w_sl = pl.ds(kw * dw, Wo, stride=sw if sw > 1 else None)
        patch = x_ref[0, h_sl, w_sl, :]                   # (TH, Wo, C)
        # NOTE: this relayout is only free when Wo % 8 == 0; for Wo = 7/14/28
        # it costs a sublane relayout per tap.
        return patch.reshape(th * Wo, C).astype(compute_dtype)

    if fold_taps:
        # Small C (< 128): fold the KH*KW taps into one (TH*Wo, KH*KW*C) slab
        # so a single MXU matmul gets contraction depth KH*KW*C instead of
        # KH*KW shallow matmuls.
        slab = jnp.concatenate(
            [tap_patch(kh, kw) for kh in range(KH) for kw in range(KW)],
            axis=-1)
        acc = jnp.dot(slab, w_ref[...], preferred_element_type=jnp.float32)
    else:
        # Large C (>= 128): each tap already has MXU-friendly depth; skip the
        # slab materialization (saves ~1 MiB VMEM per step and a full vst
        # pass) and accumulate per-tap matmuls in f32.
        acc = jnp.zeros((th * Wo, TO), jnp.float32)
        tap = 0
        for kh in range(KH):
            for kw in range(KW):
                acc += jnp.dot(tap_patch(kh, kw),
                               w_ref[tap * C:(tap + 1) * C, :],
                               preferred_element_type=jnp.float32)
                tap += 1

    acc = acc + b_ref[...]                                # (1, TO) broadcast
    o_ref[0] = acc.reshape(th, Wo, TO).astype(o_ref.dtype)


def meta_conv2d(x_nchw, weight_oihw, bias=None, *, stride=(1, 1),
                padding=(0, 0), dilation=(1, 1), groups=1, mxu_dtype=None):
    """Pallas implementation of F.conv2d (NCHW in / NCHW out).

    mxu_dtype: optional dtype (e.g. jnp.bfloat16) for the MXU operands when the
      caller passes f32 — an explicit mixed-precision policy choice (f32
      accumulation is always kept).  Default None reproduces F.conv2d in the
      activation dtype.
    """
    if groups != 1:
        # TODO(synk): grouped / depthwise convolution (groups > 1) not implemented.
        raise NotImplementedError("groups != 1 not supported")

    def _pair(v):
        return (v, v) if isinstance(v, int) else tuple(v)

    stride, padding, dilation = _pair(stride), _pair(padding), _pair(dilation)
    sh, sw = stride
    ph, pw = padding
    dh, dw = dilation

    N, C, H, W = x_nchw.shape
    O, Cw, KH, KW = weight_oihw.shape
    assert Cw == C

    Ho = (H + 2 * ph - dh * (KH - 1) - 1) // sh + 1
    Wo = (W + 2 * pw - dw * (KW - 1) - 1) // sw + 1
    out_dtype = x_nchw.dtype
    # Mixed-precision policy: weights are run in the activation dtype (or in
    # mxu_dtype if given).  This differs from F.conv2d with f32 weights + bf16
    # activations; made explicit here per review.
    compute_dtype = jnp.dtype(mxu_dtype) if mxu_dtype is not None else jnp.dtype(out_dtype)

    # --- layout / padding plumbing (plain JAX) ------------------------------
    # TODO(synk): keep activations NHWC across layers and fold the spatial zero
    #             padding into edge-tile masking / a pre-zeroed VMEM buffer in
    #             the kernel to avoid these extra HBM passes (and drop the
    #             final NCHW transpose).
    x_nhwc = jnp.transpose(x_nchw, (0, 2, 3, 1))
    x_pad = jnp.pad(x_nhwc, ((0, 0), (ph, ph), (pw, pw), (0, 0)))
    Hp, Wp = x_pad.shape[1], x_pad.shape[2]

    # im2col-flattened weight: (KH,KW,C,O) -> (KH*KW*C, O_pad), O padded to 128.
    Op = _round_up(O, 128)
    w_2d = jnp.transpose(weight_oihw, (2, 3, 1, 0)).astype(compute_dtype)
    w_2d = w_2d.reshape(KH * KW * C, O)
    w_2d = jnp.pad(w_2d, ((0, 0), (0, Op - O)))

    if bias is None:
        b = jnp.zeros((1, Op), jnp.float32)
    else:
        b = jnp.pad(bias.astype(jnp.float32).reshape(1, O),
                    ((0, 0), (0, Op - O)))

    # --- tiling -------------------------------------------------------------
    kind = _device_kind()
    # v5-class chips: 128-wide MXU + single vst slot -> keep to=128 there.
    if "v5" in kind:
        to = 128
    else:
        to = 256 if Op % 256 == 0 else 128
    th = _pick_row_tile(Ho, Wo, m_target=512)   # output rows per grid step
    K2 = KH * KW * C
    fold_taps = C < 128                          # stem-style small-C layers only

    # Grid: row-tile axis innermost so the weight tile stays VMEM-resident
    # across all row tiles; the whole padded image stays resident per batch.
    grid = (N, Op // to, Ho // th)

    kernel = functools.partial(
        _conv2d_kernel, kh_kw=(KH, KW), stride=(sh, sw), dilation=(dh, dw),
        row_tile=th, fold_taps=fold_taps)

    # --- VMEM budget (double-buffered blocks + in-kernel temporaries) -------
    x_bytes = Hp * Wp * C * x_pad.dtype.itemsize
    w_tile_bytes = K2 * to * w_2d.dtype.itemsize
    b_tile_bytes = to * 4
    out_tile_bytes = th * Wo * to * jnp.dtype(out_dtype).itemsize
    acc_bytes = th * Wo * to * 4
    slab_bytes = th * Wo * K2 * compute_dtype.itemsize if fold_taps else 0
    needed = (2 * (x_bytes + w_tile_bytes + b_tile_bytes + out_tile_bytes)
              + acc_bytes + slab_bytes)
    vmem_cap = (40 << 20) if "7" in kind else (64 << 20)   # v7x has 64 MiB VMEM
    vmem_limit = int(min(max(needed + (8 << 20), 32 << 20), vmem_cap))
    # TODO(synk): for very large feature maps (esp. v7x's 64 MiB VMEM) switch
    #             the x BlockSpec to a halo'd row-window instead of keeping the
    #             whole padded image resident.

    # --- cost estimate (weight is re-streamed once per (n, O-tile)) ---------
    flops = 2 * N * Ho * Wo * Op * KH * KW * C
    bytes_accessed = int(
        x_pad.size * x_pad.dtype.itemsize                      # x: once per batch
        + N * (Op // to) * w_tile_bytes                        # weight restream
        + N * (Op // to) * b_tile_bytes
        + N * Ho * Wo * Op * jnp.dtype(out_dtype).itemsize)    # output write

    out_nhwc = pl.pallas_call(
        kernel,
        out_shape=jax.ShapeDtypeStruct((N, Ho, Wo, Op), out_dtype),
        grid_spec=pltpu.PrefetchScalarGridSpec(
            num_scalar_prefetch=0,
            grid=grid,
            in_specs=[
                # Whole padded image stays resident while O/row tiles sweep.
                pl.BlockSpec((1, Hp, Wp, C), lambda n, j, i: (n, 0, 0, 0)),
                # Weight tile: constant across the innermost row axis.
                pl.BlockSpec((K2, to), lambda n, j, i: (0, j)),
                pl.BlockSpec((1, to), lambda n, j, i: (0, j)),
            ],
            out_specs=pl.BlockSpec((1, th, Wo, to),
                                   lambda n, j, i: (n, i, 0, j)),
        ),
        compiler_params=pltpu.CompilerParams(
            # All grid axes are independent (no cross-step reduction).
            dimension_semantics=("parallel", "parallel", "parallel"),
            vmem_limit_bytes=vmem_limit,
        ),
        cost_estimate=pl.CostEstimate(
            flops=flops, transcendentals=0, bytes_accessed=bytes_accessed),
    )(x_pad, w_2d, b)

    # Drop padded output channels and go back to NCHW.
    return jnp.transpose(out_nhwc[..., :O], (0, 3, 1, 2))


def _ref_conv(x, w, b, stride, padding, dilation):
    return jax.lax.conv_general_dilated(
        x, w, window_strides=stride, padding=[padding, padding],
        rhs_dilation=dilation,
        dimension_numbers=("NCHW", "OIHW", "NCHW"),
    ) + b[None, :, None, None]


if __name__ == "__main__":
    # MetaConv2d(in_channels=4, out_channels=8, kernel_size=3, stride=1,
    #            padding=1, dilation=1, groups=1, bias=True)
    key = jax.random.PRNGKey(0)
    kx, kw, kb = jax.random.split(key, 3)

    # --- Test 1: small-C folded-slab path -----------------------------------
    N, C, H, W = 2, 4, 16, 16
    O, KH, KW = 8, 3, 3
    x = jax.random.normal(kx, (N, C, H, W), jnp.float32)
    weight = jax.random.normal(kw, (O, C, KH, KW), jnp.float32) * 0.1
    bias = jax.random.normal(kb, (O,), jnp.float32) * 0.1

    out = meta_conv2d(x, weight, bias, stride=(1, 1), padding=(1, 1),
                      dilation=(1, 1), groups=1)
    out = jax.block_until_ready(out)

    ref = _ref_conv(x, weight, bias, (1, 1), (1, 1), (1, 1))
    assert out.shape == ref.shape
    assert out.dtype == ref.dtype
    assert jnp.allclose(out, ref, atol=1e-4, rtol=1e-4)

    # --- Test 2: per-tap accumulation path (C >= 128) -----------------------
    k2x, k2w, k2b = jax.random.split(jax.random.PRNGKey(1), 3)
    N2, C2, H2, W2, O2 = 1, 128, 8, 8, 128
    x2 = jax.random.normal(k2x, (N2, C2, H2, W2), jnp.float32)
    w2 = jax.random.normal(k2w, (O2, C2, 3, 3), jnp.float32) * 0.05
    b2 = jax.random.normal(k2b, (O2,), jnp.float32) * 0.05

    out2 = meta_conv2d(x2, w2, b2, stride=(1, 1), padding=(1, 1),
                       dilation=(1, 1), groups=1)
    out2 = jax.block_until_ready(out2)
    ref2 = _ref_conv(x2, w2, b2, (1, 1), (1, 1), (1, 1))
    assert out2.shape == ref2.shape
    # Looser tolerance: deep (1152) contraction and TPU default matmul
    # precision may differ slightly from XLA's conv.
    assert jnp.allclose(out2, ref2, atol=5e-2, rtol=5e-2)

    print("KERNEL_OK")
</pallas_src>

<mosaic_0001>
module attributes {stable_mosaic.version = 11 : i64} {
  func.func @_conv2d_kernel(%arg0: i32, %arg1: i32, %arg2: i32, %arg3: memref<1x18x18x4xf32, #tpu.memory_space<vmem>>, %arg4: memref<36x128xf32, #tpu.memory_space<vmem>>, %arg5: memref<1x128xf32, #tpu.memory_space<vmem>>, %arg6: memref<1x16x16x128xf32, #tpu.memory_space<vmem>>) attributes {dimension_semantics = [#tpu.dimension_semantics<parallel>, #tpu.dimension_semantics<parallel>, #tpu.dimension_semantics<parallel>], iteration_bounds = array<i64: 2, 1, 1>, scalar_prefetch = 0 : i64, scratch_operands = 0 : i64, tpu.core_type = #tpu.core_type<tc>, window_params = [{transform_indices = @transform_0, window_bounds = array<i64: 1, 18, 18, 4>}, {transform_indices = @transform_1, window_bounds = array<i64: 36, 128>}, {transform_indices = @transform_2, window_bounds = array<i64: 1, 128>}, {transform_indices = @transform_3, window_bounds = array<i64: 1, 16, 16, 128>}]} {
    %c16_i32 = arith.constant 16 : i32
    %0 = arith.muli %arg2, %c16_i32 : i32
    %1 = tpu.assume_multiple %0, 16 : i32
    %c0_i32 = arith.constant 0 : i32
    %2 = arith.addi %1, %c0_i32 : i32
    %c0 = arith.constant 0 : index
    %3 = arith.index_cast %2 : i32 to index
    %c0_0 = arith.constant 0 : index
    %c0_1 = arith.constant 0 : index
    %4 = vector.load %arg3[%c0, %3, %c0_0, %c0_1] : memref<1x18x18x4xf32, #tpu.memory_space<vmem>>, vector<1x16x16x4xf32>
    %5 = vector.shape_cast %4 : vector<1x16x16x4xf32> to vector<16x16x4xf32>
    %6 = vector.shape_cast %5 : vector<16x16x4xf32> to vector<256x4xf32>
    %c0_i32_2 = arith.constant 0 : i32
    %7 = arith.addi %1, %c0_i32_2 : i32
    %c0_3 = arith.constant 0 : index
    %8 = arith.index_cast %7 : i32 to index
    %c1 = arith.constant 1 : index
    %c0_4 = arith.constant 0 : index
    %9 = vector.load %arg3[%c0_3, %8, %c1, %c0_4] : memref<1x18x18x4xf32, #tpu.memory_space<vmem>>, vector<1x16x16x4xf32>
    %10 = vector.shape_cast %9 : vector<1x16x16x4xf32> to vector<16x16x4xf32>
    %11 = vector.shape_cast %10 : vector<16x16x4xf32> to vector<256x4xf32>
    %c0_i32_5 = arith.constant 0 : i32
    %12 = arith.addi %1, %c0_i32_5 : i32
    %c0_6 = arith.constant 0 : index
    %13 = arith.index_cast %12 : i32 to index
    %c2 = arith.constant 2 : index
    %c0_7 = arith.constant 0 : index
    %14 = vector.load %arg3[%c0_6, %13, %c2, %c0_7] : memref<1x18x18x4xf32, #tpu.memory_space<vmem>>, vector<1x16x16x4xf32>
    %15 = vector.shape_cast %14 : vector<1x16x16x4xf32> to vector<16x16x4xf32>
    %16 = vector.shape_cast %15 : vector<16x16x4xf32> to vector<256x4xf32>
    %c1_i32 = arith.constant 1 : i32
    %17 = arith.addi %1, %c1_i32 : i32
    %c0_8 = arith.constant 0 : index
    %18 = arith.index_cast %17 : i32 to index
    %c0_9 = arith.constant 0 : index
    %c0_10 = arith.constant 0 : index
    %19 = vector.load %arg3[%c0_8, %18, %c0_9, %c0_10] : memref<1x18x18x4xf32, #tpu.memory_space<vmem>>, vector<1x16x16x4xf32>
    %20 = vector.shape_cast %19 : vector<1x16x16x4xf32> to vector<16x16x4xf32>
    %21 = vector.shape_cast %20 : vector<16x16x4xf32> to vector<256x4xf32>
    %c1_i32_11 = arith.constant 1 : i32
    %22 = arith.addi %1, %c1_i32_11 : i32
    %c0_12 = arith.constant 0 : index
    %23 = arith.index_cast %22 : i32 to index
    %c1_13 = arith.constant 1 : index
    %c0_14 = arith.constant 0 : index
    %24 = vector.load %arg3[%c0_12, %23, %c1_13, %c0_14] : memref<1x18x18x4xf32, #tpu.memory_space<vmem>>, vector<1x16x16x4xf32>
    %25 = vector.shape_cast %24 : vector<1x16x16x4xf32> to vector<16x16x4xf32>
    %26 = vector.shape_cast %25 : vector<16x16x4xf32> to vector<256x4xf32>
    %c1_i32_15 = arith.constant 1 : i32
    %27 = arith.addi %1, %c1_i32_15 : i32
    %c0_16 = arith.constant 0 : index
    %28 = arith.index_cast %27 : i32 to index
    %c2_17 = arith.constant 2 : index
    %c0_18 = arith.constant 0 : index
    %29 = vector.load %arg3[%c0_16, %28, %c2_17, %c0_18] : memref<1x18x18x4xf32, #tpu.memory_space<vmem>>, vector<1x16x16x4xf32>
    %30 = vector.shape_cast %29 : vector<1x16x16x4xf32> to vector<16x16x4xf32>
    %31 = vector.shape_cast %30 : vector<16x16x4xf32> to vector<256x4xf32>
    %c2_i32 = arith.constant 2 : i32
    %32 = arith.addi %1, %c2_i32 : i32
    %c0_19 = arith.constant 0 : index
    %33 = arith.index_cast %32 : i32 to index
    %c0_20 = arith.constant 0 : index
    %c0_21 = arith.constant 0 : index
    %34 = vector.load %arg3[%c0_19, %33, %c0_20, %c0_21] : memref<1x18x18x4xf32, #tpu.memory_space<vmem>>, vector<1x16x16x4xf32>
    %35 = vector.shape_cast %34 : vector<1x16x16x4xf32> to vector<16x16x4xf32>
    %36 = vector.shape_cast %35 : vector<16x16x4xf32> to vector<256x4xf32>
    %c2_i32_22 = arith.constant 2 : i32
    %37 = arith.addi %1, %c2_i32_22 : i32
    %c0_23 = arith.constant 0 : index
    %38 = arith.index_cast %37 : i32 to index
    %c1_24 = arith.constant 1 : index
    %c0_25 = arith.constant 0 : index
    %39 = vector.load %arg3[%c0_23, %38, %c1_24, %c0_25] : memref<1x18x18x4xf32, #tpu.memory_space<vmem>>, vector<1x16x16x4xf32>
    %40 = vector.shape_cast %39 : vector<1x16x16x4xf32> to vector<16x16x4xf32>
    %41 = vector.shape_cast %40 : vector<16x16x4xf32> to vector<256x4xf32>
    %c2_i32_26 = arith.constant 2 : i32
    %42 = arith.addi %1, %c2_i32_26 : i32
    %c0_27 = arith.constant 0 : index
    %43 = arith.index_cast %42 : i32 to index
    %c2_28 = arith.constant 2 : index
    %c0_29 = arith.constant 0 : index
    %44 = vector.load %arg3[%c0_27, %43, %c2_28, %c0_29] : memref<1x18x18x4xf32, #tpu.memory_space<vmem>>, vector<1x16x16x4xf32>
    %45 = vector.shape_cast %44 : vector<1x16x16x4xf32> to vector<16x16x4xf32>
    %46 = vector.shape_cast %45 : vector<16x16x4xf32> to vector<256x4xf32>
    %47 = tpu.concatenate %6, %11, %16, %21, %26, %31, %36, %41, %46 in 1 : vector<256x4xf32>, vector<256x4xf32>, vector<256x4xf32>, vector<256x4xf32>, vector<256x4xf32>, vector<256x4xf32>, vector<256x4xf32>, vector<256x4xf32>, vector<256x4xf32> -> vector<256x36xf32>
    %c0_30 = arith.constant 0 : index
    %c0_31 = arith.constant 0 : index
    %48 = vector.load %arg4[%c0_30, %c0_31] : memref<36x128xf32, #tpu.memory_space<vmem>>, vector<36x128xf32>
    %cst = arith.constant dense<0.000000e+00> : vector<256x128xf32>
    %49 = tpu.matmul %47, %48, %cst {dimension_numbers = #tpu.dot_dimension_numbers<[1], [0], [0], [1], [0, 0, 1, 1], [], []>} : vector<256x36xf32>, vector<36x128xf32>, vector<256x128xf32> -> vector<256x128xf32>
    %c0_32 = arith.constant 0 : index
    %c0_33 = arith.constant 0 : index
    %50 = vector.load %arg5[%c0_32, %c0_33] : memref<1x128xf32, #tpu.memory_space<vmem>>, vector<1x128xf32>
    %51 = vector.broadcast %50 : vector<1x128xf32> to vector<256x128xf32>
    %52 = arith.addf %49, %51 : vector<256x128xf32>
    %53 = vector.shape_cast %52 : vector<256x128xf32> to vector<16x16x128xf32>
    %c0_34 = arith.constant 0 : index
    %c0_35 = arith.constant 0 : index
    %c0_36 = arith.constant 0 : index
    %c0_37 = arith.constant 0 : index
    %54 = vector.load %arg6[%c0_34, %c0_35, %c0_36, %c0_37] : memref<1x16x16x128xf32, #tpu.memory_space<vmem>>, vector<1x16x16x128xf32>
    %55 = vector.shape_cast %54 : vector<1x16x16x128xf32> to vector<16x16x128xf32>
    %56 = vector.shape_cast %53 : vector<16x16x128xf32> to vector<1x16x16x128xf32>
    tpu.vector_store %arg6[%c0_34, %c0_35, %c0_36, %c0_37], %56 {strides = array<i32>} : memref<1x16x16x128xf32, #tpu.memory_space<vmem>>, vector<1x16x16x128xf32>,
    return
  }
  func.func @transform_0(%arg0: i32, %arg1: i32, %arg2: i32) -> (i32, i32, i32, i32) {
    %c0_i32 = arith.constant 0 : i32
    %c0_i32_0 = arith.constant 0 : i32
    %c0_i32_1 = arith.constant 0 : i32
    %c0_i32_2 = arith.constant 0 : i32
    return %arg0, %c0_i32, %c0_i32_0, %c0_i32_1 : i32, i32, i32, i32
  }
  func.func @transform_1(%arg0: i32, %arg1: i32, %arg2: i32) -> (i32, i32) {
    %c0_i32 = arith.constant 0 : i32
    %c0_i32_0 = arith.constant 0 : i32
    return %c0_i32, %arg1 : i32, i32
  }
  func.func @transform_2(%arg0: i32, %arg1: i32, %arg2: i32) -> (i32, i32) {
    %c0_i32 = arith.constant 0 : i32
    %c0_i32_0 = arith.constant 0 : i32
    return %c0_i32, %arg1 : i32, i32
  }
  func.func @transform_3(%arg0: i32, %arg1: i32, %arg2: i32) -> (i32, i32, i32, i32) {
    %c0_i32 = arith.constant 0 : i32
    %c0_i32_0 = arith.constant 0 : i32
    return %arg0, %arg2, %c0_i32, %arg1 : i32, i32, i32, i32
  }
}

</mosaic_0001>

<llo_original>
// kernel: tpu_custom_call.1
$region0: #{tpu_custom_call.1}
  #allocation0 [shape = 'u32[]', space=smem, size = 0x4, offset = 0x4, fixed_abs, tag = 'smem constant byte address 0x4 - core index']
  #allocation1 [shape = 'u32[144,128]{1,0:T(1,128)}', space=vmem, size = 0x12000, scoped, tag = 'internal scratch']
  %s0 = inlined_call_operand.vmem [shape: f32[2,18,18,4], index: 0, kind: input, shape index: {}]
  %s1 = inlined_call_operand.vmem [shape: f32[36,128], index: 1, kind: input, shape index: {}]
  %s2 = inlined_call_operand.vmem [shape: f32[1,128], index: 2, kind: input, shape index: {}]
  %s3 = inlined_call_operand.hbm [shape: f32[2,16,16,128], index: 3, kind: output, shape index: {}]
  %s4 = sld [smem:[#allocation0]]
  $region45: #{tpu_custom_call.1} parent=0
    _
  %s6 = ssub.s32 1, %s4
  %s7 = scalar_select 0, %s6, %s4
  $region1: #{tpu_custom_call.1} parent=0
    #allocation2 [shape = 'u8[262144]{0}', space=vmem, size = 0x40000, scoped, tag = 'output window, operand 0']
    #allocation3 [shape = 's32[2]{0}', space=sflag, size = 0x8, scoped, tag = 'scoped memory for tpu_custom_call.1']
    %8 = vsyncpa [#allocation3], 0
    %s9 = scalar_lea.sflag [#allocation3], 1
    %10 = vsyncpa %s9, 0
    loop: start=0, step=1, limit=4
    $region2: #{tpu_custom_call.1} parent=1 // loop_pre_header
      _
    $region3: #{tpu_custom_call.1} parent=1 // loop_header
      %s12 = sphi 0, %s16
      %p13 = scmp.ge.s32.totalorder %s12, 4
      %s19 = sphi 0, %s38
      %s20 = sphi 0, %s34
      %s21 = sphi 0, %s30
      %s22 = sphi 0, %s19
      %s23 = sphi 0, %s20
      %s24 = sphi 0, %s21
      %s25 = sphi 0, %s22
      %s26 = sphi 0, %s23
      %s27 = sphi 0, %s24
      %s41 = sphi 0, %s43
      %s44 = sphi 0, %s41
      %s45 = sphi 0, %s44
      %s61 = sphi 0, %s45
      %s67 = sphi 0, %s69
      %s70 = sphi 0, %s67
      %s71 = sphi 0, %s70
      %s87 = sphi 0, %s71
      %s93 = sphi 0, %s95
      %s96 = sphi 0, %s93
      %s97 = sphi 0, %s96
      %s113 = sphi 0, %s97
      %s123 = sphi 0, %s125
      %s126 = sphi 0, %s123
      %s127 = sphi 0, %s126
      %s143 = sphi 0, %s127
    $region4: #{tpu_custom_call.1} parent=1 // loop_header_branch
      %15 = sbr.rel (%p13) target = $region8
    $region5: #{tpu_custom_call.1} parent=1 // loop_body
      %s17 = ssub.s32 %s12, 1
      %s18 = ssub.s32 %s12, 2
      %s28 = sadd.s32 1, %s21
      %p29 = scmp.ge.s32.totalorder %s28, 1
      %s30 = scalar_select %p29, 0, %s28
      %s31 = sadd.s32 1, %s20
      %s32 = scalar_select %p29, %s31, %s20
      %p33 = scmp.ge.s32.totalorder %s32, 1
      %s34 = scalar_select %p33, 0, %s32
      %s35 = sadd.s32 1, %s19
      %s36 = scalar_select %p33, %s35, %s19
      %p37 = scmp.ge.s32.totalorder %s36, 2
      %s38 = scalar_select %p37, 0, %s36
      %s39 = ssub.s32 %s19, %s38
      %p40 = scmp.eq.s32.totalorder %s39, 0
      %s42 = sadd.s32 %s41, 1
      %s43 = scalar_select %p40, %s41, %s42
      %p46 = pneg %p40
      %p47 = scmp.eq.s32.totalorder %s12, 1
      %p48 = por %p46, %p47
      %p49 = scmp.ne.s32.totalorder %s41, %s44
      %p50 = scmp.eq.s32.totalorder %s12, 0
      %p51 = por %p49, %p50
      %p52 = scmp.ne.s32.totalorder %s41, %s44
      %p53 = scmp.eq.s32.totalorder %s17, 1
      %p54 = por %p52, %p53
      %p55 = scmp.ne.s32.totalorder %s44, %s45
      %p56 = scmp.eq.s32.totalorder %s17, 0
      %p57 = por %p55, %p56
      %p58 = scmp.ne.s32.totalorder %s44, %s45
      %p59 = scmp.eq.s32.totalorder %s18, 1
      %p60 = por %p58, %p59
      %p62 = scmp.ne.s32.totalorder %s45, %s61
      %p63 = scmp.eq.s32.totalorder %s18, 0
      %p64 = por %p62, %p63
      %s65 = ssub.s32 %s20, %s34
      %p66 = scmp.eq.s32.totalorder %s65, 0
      %s68 = sadd.s32 %s67, 1
      %s69 = scalar_select %p66, %s67, %s68
      %p72 = pneg %p66
      %p73 = scmp.eq.s32.totalorder %s12, 1
      %p74 = por %p72, %p73
      %p75 = scmp.ne.s32.totalorder %s67, %s70
      %p76 = scmp.eq.s32.totalorder %s12, 0
      %p77 = por %p75, %p76
      %p78 = scmp.ne.s32.totalorder %s67, %s70
      %p79 = scmp.eq.s32.totalorder %s17, 1
      %p80 = por %p78, %p79
      %p81 = scmp.ne.s32.totalorder %s70, %s71
      %p82 = scmp.eq.s32.totalorder %s17, 0
      %p83 = por %p81, %p82
      %p84 = scmp.ne.s32.totalorder %s70, %s71
      %p85 = scmp.eq.s32.totalorder %s18, 1
      %p86 = por %p84, %p85
      %p88 = scmp.ne.s32.totalorder %s71, %s87
      %p89 = scmp.eq.s32.totalorder %s18, 0
      %p90 = por %p88, %p89
      %s91 = ssub.s32 %s20, %s34
      %p92 = scmp.eq.s32.totalorder %s91, 0
      %s94 = sadd.s32 %s93, 1
      %s95 = scalar_select %p92, %s93, %s94
      %p98 = pneg %p92
      %p99 = scmp.eq.s32.totalorder %s12, 1
      %p100 = por %p98, %p99
      %p101 = scmp.ne.s32.totalorder %s93, %s96
      %p102 = scmp.eq.s32.totalorder %s12, 0
      %p103 = por %p101, %p102
      %p104 = scmp.ne.s32.totalorder %s93, %s96
      %p105 = scmp.eq.s32.totalorder %s17, 1
      %p106 = por %p104, %p105
      %p107 = scmp.ne.s32.totalorder %s96, %s97
      %p108 = scmp.eq.s32.totalorder %s17, 0
      %p109 = por %p107, %p108
      %p110 = scmp.ne.s32.totalorder %s96, %s97
      %p111 = scmp.eq.s32.totalorder %s18, 1
      %p112 = por %p110, %p111
      %p114 = scmp.ne.s32.totalorder %s97, %s113
      %p115 = scmp.eq.s32.totalorder %s18, 0
      %p116 = por %p114, %p115
      %s117 = ssub.s32 %s19, %s38
      %s118 = ssub.s32 %s21, %s30
      %s119 = sor.u32 %s117, %s118
      %s120 = ssub.s32 %s20, %s34
      %s121 = sor.u32 %s119, %s120
      %p122 = scmp.eq.s32.totalorder %s121, 0
      %s124 = sadd.s32 %s123, 1
      %s125 = scalar_select %p122, %s123, %s124
      %p128 = pneg %p122
      %p129 = scmp.eq.s32.totalorder %s12, 1
      %p130 = por %p128, %p129
      %p131 = scmp.ne.s32.totalorder %s123, %s126
      %p132 = scmp.eq.s32.totalorder %s12, 0
      %p133 = por %p131, %p132
      %p134 = scmp.ne.s32.totalorder %s123, %s126
      %p135 = scmp.eq.s32.totalorder %s17, 1
      %p136 = por %p134, %p135
      %p137 = scmp.ne.s32.totalorder %s126, %s127
      %p138 = scmp.eq.s32.totalorder %s17, 0
      %p139 = por %p137, %p138
      %p140 = scmp.ne.s32.totalorder %s126, %s127
      %p141 = scmp.eq.s32.totalorder %s18, 1
      %p142 = por %p140, %p141
      %p144 = scmp.ne.s32.totalorder %s127, %s143
      %p145 = scmp.eq.s32.totalorder %s18, 0
      %p146 = por %p144, %p145
      %p147 = scmp.le.s32.totalorder 1, %s12
      %p148 = scmp.lt.s32.totalorder %s12, 3
      %p149 = pnand %p147, %p148
      %p150 = pneg %p149
      // Predicated region
      $region9: #{tpu_custom_call.1} parent=5 // pred_check
        _
      $region10: #{tpu_custom_call.1} parent=5 // pred_check_branch
        %152 = sbr.rel (%p149) target = $region12
      $region11: #{tpu_custom_call.1} parent=5 // pred_region
        %s153 = ssub.s32 %s12, 1
        // Predicated region
        $region13: #{tpu_custom_call.1} parent=11 // pred_check
          %p154 = pneg %p83
        $region14: #{tpu_custom_call.1} parent=11 // pred_check_branch
          %156 = sbr.rel (%p154) target = $region16
        $region15: #{tpu_custom_call.1} parent=11 // pred_region
          %p157 = scmp.lt.s32.totalorder %s23, 0
          %s158 = scalar_select %p157, %s23, 0
          %s159 = smul.addr %s158, 8
          %s160 = scalar_lea.vmem %s1, %s159
        $region16: #{tpu_custom_call.1} parent=11 // pred_fallthru
          _
        // Predicated region
        $region17: #{tpu_custom_call.1} parent=11 // pred_check
          %p161 = pneg %p109
        $region18: #{tpu_custom_call.1} parent=11 // pred_check_branch
          %163 = sbr.rel (%p161) target = $region20
        $region19: #{tpu_custom_call.1} parent=11 // pred_region
          %p164 = scmp.lt.s32.totalorder %s23, 0
          %s165 = scalar_select %p164, %s23, 0
          %s166 = scalar_lea.vmem %s2, %s165
        $region20: #{tpu_custom_call.1} parent=11 // pred_fallthru
          _
      $region12: #{tpu_custom_call.1} parent=5 // pred_fallthru
        _
      %p167 = scmp.lt.s32.totalorder %s12, 2
      // Predicated region
      $region21: #{tpu_custom_call.1} parent=5 // pred_check
        %p168 = pneg %p167
      $region22: #{tpu_custom_call.1} parent=5 // pred_check_branch
        %170 = sbr.rel (%p168) target = $region24
      $region23: #{tpu_custom_call.1} parent=5 // pred_region
        // Predicated region
        $region25: #{tpu_custom_call.1} parent=23 // pred_check
          %p171 = pneg %p51
        $region26: #{tpu_custom_call.1} parent=23 // pred_check_branch
          %173 = sbr.rel (%p171) target = $region28
        $region27: #{tpu_custom_call.1} parent=23 // pred_region
          %p174 = scmp.lt.s32.totalorder %s19, 1
          %s175 = scalar_select %p174, %s19, 1
          %s176 = smul.addr %s175, 54
          %s177 = smul.addr %s176, 8
          %s178 = scalar_lea.vmem %s0, %s177
        $region28: #{tpu_custom_call.1} parent=23 // pred_fallthru
          _
      $region24: #{tpu_custom_call.1} parent=5 // pred_fallthru
        _
      %p179 = scmp.le.s32.totalorder 1, %s12
      %p180 = scmp.lt.s32.totalorder %s12, 3
      %p181 = pnand %p179, %p180
      %p182 = pneg %p181
      // Predicated region
      $region29: #{tpu_custom_call.1} parent=5 // pred_check
        _
      $region30: #{tpu_custom_call.1} parent=5 // pred_check_branch
        %184 = sbr.rel (%p181) target = $region32
      $region31: #{tpu_custom_call.1} parent=5 // pred_region
        %s185 = ssub.s32 %s12, 1
        %p186 = scmp.lt.s32.totalorder %s22, 1
        %s187 = scalar_select %p186, %s22, 1
        %s188 = smul.addr %s187, 54
        %s189 = smul.addr %s188, 8
        %s190 = scalar_lea.vmem %s0, %s189
        %p191 = pneg %p57
        %p192 = pneg %p54
        %p193 = scmp.lt.s32.totalorder %s23, 0
        %s194 = scalar_select %p193, %s23, 0
        %s195 = smul.addr %s194, 8
        %s196 = scalar_lea.vmem %s1, %s195
        %p197 = pneg %p83
        %p198 = pneg %p80
        %p199 = scmp.lt.s32.totalorder %s23, 0
        %s200 = scalar_select %p199, %s23, 0
        %s201 = scalar_lea.vmem %s2, %s200
        %p202 = pneg %p109
        %p203 = pneg %p106
        %p204 = pneg %p139
        %p205 = pneg %p136
        %s206 = sand.u32 %s126, 1
        %s207 = scalar_lea.sflag [#allocation3], %s206
        %s208 = sand.u32 %s126, 1
        %s209 = smul.addr %s208, 256
        %s210 = scalar_lea.vmem [#allocation2], %s209
        %p211 = scmp.lt.s32.totalorder %s22, 1
        %s212 = scalar_select %p211, %s22, 1
        %s213 = smul.addr %s212, 54
        %s214 = smul.addr %s213, 8
        %s215 = scalar_lea.vmem %s0, %s214
        %p216 = scmp.lt.s32.totalorder %s23, 0
        %s217 = scalar_select %p216, %s23, 0
        %s218 = smul.addr %s217, 8
        %s219 = scalar_lea.vmem %s1, %s218
        %p220 = scmp.lt.s32.totalorder %s23, 0
        %s221 = scalar_select %p220, %s23, 0
        %s222 = scalar_lea.vmem %s2, %s221
        %s223 = smul.u32 16, %s24
        %s224 = smul.u32 %s24, 16
        %s225 = smul.u32 %s224, 24
        %s226 = scalar_lea.vmem %s215, %s225
        %v227 = vld [vmem:[%s226] sm:$0xff]
        %v228 = vld [vmem:[%s226 + $0x8] sm:$0xff]
        %v229 = vld [vmem:[%s226 + $0x18] sm:$0xff]
        %v230 = vld [vmem:[%s226 + $0x20] sm:$0xff]
        %v231 = vld [vmem:[%s226 + $0x30] sm:$0xff]
        %v232 = vld [vmem:[%s226 + $0x38] sm:$0xff]
        %v233 = vld [vmem:[%s226 + $0x48] sm:$0xff]
        %v234 = vld [vmem:[%s226 + $0x50] sm:$0xff]
        %v235 = vld [vmem:[%s226 + $0x60] sm:$0xff]
        %v236 = vld [vmem:[%s226 + $0x68] sm:$0xff]
        %v237 = vld [vmem:[%s226 + $0x78] sm:$0xff]
        %v238 = vld [vmem:[%s226 + $0x80] sm:$0xff]
        %v239 = vld [vmem:[%s226 + $0x90] sm:$0xff]
        %v240 = vld [vmem:[%s226 + $0x98] sm:$0xff]
        %v241 = vld [vmem:[%s226 + $0xa8] sm:$0xff]
        %v242 = vld [vmem:[%s226 + $0xb0] sm:$0xff]
        %v243 = vld [vmem:[%s226 + $0xc0] sm:$0xff]
        %v244 = vld [vmem:[%s226 + $0xc8] sm:$0xff]
        %v245 = vld [vmem:[%s226 + $0xd8] sm:$0xff]
        %v246 = vld [vmem:[%s226 + $0xe0] sm:$0xff]
        %v247 = vld [vmem:[%s226 + $0xf0] sm:$0xff]
        %v248 = vld [vmem:[%s226 + $0xf8] sm:$0xff]
        %v249 = vld [vmem:[%s226 + $0x108] sm:$0xff]
        %v250 = vld [vmem:[%s226 + $0x110] sm:$0xff]
        %v251 = vld [vmem:[%s226 + $0x120] sm:$0xff]
        %v252 = vld [vmem:[%s226 + $0x128] sm:$0xff]
        %v253 = vld [vmem:[%s226 + $0x138] sm:$0xff]
        %v254 = vld [vmem:[%s226 + $0x140] sm:$0xff]
        %v255 = vld [vmem:[%s226 + $0x150] sm:$0xff]
        %v256 = vld [vmem:[%s226 + $0x158] sm:$0xff]
        %v257 = vld [vmem:[%s226 + $0x168] sm:$0xff]
        %v258 = vld [vmem:[%s226 + $0x170] sm:$0xff]
        %v259 = vld [vmem:[%s226 + $0x1] sm:$0xff]
        %v260 = vld [vmem:[%s226 + $0x9] sm:$0xff]
        %v261 = vld [vmem:[%s226 + $0x19] sm:$0xff]
        %v262 = vld [vmem:[%s226 + $0x21] sm:$0xff]
        %v263 = vld [vmem:[%s226 + $0x31] sm:$0xff]
        %v264 = vld [vmem:[%s226 + $0x39] sm:$0xff]
        %v265 = vld [vmem:[%s226 + $0x49] sm:$0xff]
        %v266 = vld [vmem:[%s226 + $0x51] sm:$0xff]
        %v267 = vld [vmem:[%s226 + $0x61] sm:$0xff]
        %v268 = vld [vmem:[%s226 + $0x69] sm:$0xff]
        %v269 = vld [vmem:[%s226 + $0x79] sm:$0xff]
        %v270 = vld [vmem:[%s226 + $0x81] sm:$0xff]
        %v271 = vld [vmem:[%s226 + $0x91] sm:$0xff]
        %v272 = vld [vmem:[%s226 + $0x99] sm:$0xff]
        %v273 = vld [vmem:[%s226 + $0xa9] sm:$0xff]
        %v274 = vld [vmem:[%s226 + $0xb1] sm:$0xff]
        %v275 = vld [vmem:[%s226 + $0xc1] sm:$0xff]
        %v276 = vld [vmem:[%s226 + $0xc9] sm:$0xff]
        %v277 = vld [vmem:[%s226 + $0xd9] sm:$0xff]
        %v278 = vld [vmem:[%s226 + $0xe1] sm:$0xff]
        %v279 = vld [vmem:[%s226 + $0xf1] sm:$0xff]
        %v280 = vld [vmem:[%s226 + $0xf9] sm:$0xff]
        %v281 = vld [vmem:[%s226 + $0x109] sm:$0xff]
        %v282 = vld [vmem:[%s226 + $0x111] sm:$0xff]
        %v283 = vld [vmem:[%s226 + $0x121] sm:$0xff]
        %v284 = vld [vmem:[%s226 + $0x129] sm:$0xff]
        %v285 = vld [vmem:[%s226 + $0x139] sm:$0xff]
        %v286 = vld [vmem:[%s226 + $0x141] sm:$0xff]
        %v287 = vld [vmem:[%s226 + $0x151] sm:$0xff]
        %v288 = vld [vmem:[%s226 + $0x159] sm:$0xff]
        %v289 = vld [vmem:[%s226 + $0x169] sm:$0xff]
        %v290 = vld [vmem:[%s226 + $0x171] sm:$0xff]
        %v291 = vld [vmem:[%s226 + $0x2] sm:$0xff]
        %v292 = vld [vmem:[%s226 + $0xa] sm:$0xff]
        %v293 = vld [vmem:[%s226 + $0x1a] sm:$0xff]
        %v294 = vld [vmem:[%s226 + $0x22] sm:$0xff]
        %v295 = vld [vmem:[%s226 + $0x32] sm:$0xff]
        %v296 = vld [vmem:[%s226 + $0x3a] sm:$0xff]
        %v297 = vld [vmem:[%s226 + $0x4a] sm:$0xff]
        %v298 = vld [vmem:[%s226 + $0x52] sm:$0xff]
        %v299 = vld [vmem:[%s226 + $0x62] sm:$0xff]
        %v300 = vld [vmem:[%s226 + $0x6a] sm:$0xff]
        %v301 = vld [vmem:[%s226 + $0x7a] sm:$0xff]
        %v302 = vld [vmem:[%s226 + $0x82] sm:$0xff]
        %v303 = vld [vmem:[%s226 + $0x92] sm:$0xff]
        %v304 = vld [vmem:[%s226 + $0x9a] sm:$0xff]
        %v305 = vld [vmem:[%s226 + $0xaa] sm:$0xff]
        %v306 = vld [vmem:[%s226 + $0xb2] sm:$0xff]
        %v307 = vld [vmem:[%s226 + $0xc2] sm:$0xff]
        %v308 = vld [vmem:[%s226 + $0xca] sm:$0xff]
        %v309 = vld [vmem:[%s226 + $0xda] sm:$0xff]
        %v310 = vld [vmem:[%s226 + $0xe2] sm:$0xff]
        %v311 = vld [vmem:[%s226 + $0xf2] sm:$0xff]
        %v312 = vld [vmem:[%s226 + $0xfa] sm:$0xff]
        %v313 = vld [vmem:[%s226 + $0x10a] sm:$0xff]
        %v314 = vld [vmem:[%s226 + $0x112] sm:$0xff]
        %v315 = vld [vmem:[%s226 + $0x122] sm:$0xff]
        %v316 = vld [vmem:[%s226 + $0x12a] sm:$0xff]
        %v317 = vld [vmem:[%s226 + $0x13a] sm:$0xff]
        %v318 = vld [vmem:[%s226 + $0x142] sm:$0xff]
        %v319 = vld [vmem:[%s226 + $0x152] sm:$0xff]
        %v320 = vld [vmem:[%s226 + $0x15a] sm:$0xff]
        %v321 = vld [vmem:[%s226 + $0x16a] sm:$0xff]
        %v322 = vld [vmem:[%s226 + $0x172] sm:$0xff]
        %s323 = sadd.s32 %s224, 1
        %s324 = smul.u32 %s323, 24
        %s325 = scalar_lea.vmem %s215, %s324
        %v326 = vld [vmem:[%s325] sm:$0xff]
        %v327 = vld [vmem:[%s325 + $0x8] sm:$0xff]
        %v328 = vld [vmem:[%s325 + $0x18] sm:$0xff]
        %v329 = vld [vmem:[%s325 + $0x20] sm:$0xff]
        %v330 = vld [vmem:[%s325 + $0x30] sm:$0xff]
        %v331 = vld [vmem:[%s325 + $0x38] sm:$0xff]
        %v332 = vld [vmem:[%s325 + $0x48] sm:$0xff]
        %v333 = vld [vmem:[%s325 + $0x50] sm:$0xff]
        %v334 = vld [vmem:[%s325 + $0x60] sm:$0xff]
        %v335 = vld [vmem:[%s325 + $0x68] sm:$0xff]
        %v336 = vld [vmem:[%s325 + $0x78] sm:$0xff]
        %v337 = vld [vmem:[%s325 + $0x80] sm:$0xff]
        %v338 = vld [vmem:[%s325 + $0x90] sm:$0xff]
        %v339 = vld [vmem:[%s325 + $0x98] sm:$0xff]
        %v340 = vld [vmem:[%s325 + $0xa8] sm:$0xff]
        %v341 = vld [vmem:[%s325 + $0xb0] sm:$0xff]
        %v342 = vld [vmem:[%s325 + $0xc0] sm:$0xff]
        %v343 = vld [vmem:[%s325 + $0xc8] sm:$0xff]
        %v344 = vld [vmem:[%s325 + $0xd8] sm:$0xff]
        %v345 = vld [vmem:[%s325 + $0xe0] sm:$0xff]
        %v346 = vld [vmem:[%s325 + $0xf0] sm:$0xff]
        %v347 = vld [vmem:[%s325 + $0xf8] sm:$0xff]
        %v348 = vld [vmem:[%s325 + $0x108] sm:$0xff]
        %v349 = vld [vmem:[%s325 + $0x110] sm:$0xff]
        %v350 = vld [vmem:[%s325 + $0x120] sm:$0xff]
        %v351 = vld [vmem:[%s325 + $0x128] sm:$0xff]
        %v352 = vld [vmem:[%s325 + $0x138] sm:$0xff]
        %v353 = vld [vmem:[%s325 + $0x140] sm:$0xff]
        %v354 = vld [vmem:[%s325 + $0x150] sm:$0xff]
        %v355 = vld [vmem:[%s325 + $0x158] sm:$0xff]
        %v356 = vld [vmem:[%s325 + $0x168] sm:$0xff]
        %v357 = vld [vmem:[%s325 + $0x170] sm:$0xff]
        %v358 = vld [vmem:[%s325 + $0x1] sm:$0xff]
        %v359 = vld [vmem:[%s325 + $0x9] sm:$0xff]
        %v360 = vld [vmem:[%s325 + $0x19] sm:$0xff]
        %v361 = vld [vmem:[%s325 + $0x21] sm:$0xff]
        %v362 = vld [vmem:[%s325 + $0x31] sm:$0xff]
        %v363 = vld [vmem:[%s325 + $0x39] sm:$0xff]
        %v364 = vld [vmem:[%s325 + $0x49] sm:$0xff]
        %v365 = vld [vmem:[%s325 + $0x51] sm:$0xff]
        %v366 = vld [vmem:[%s325 + $0x61] sm:$0xff]
        %v367 = vld [vmem:[%s325 + $0x69] sm:$0xff]
        %v368 = vld [vmem:[%s325 + $0x79] sm:$0xff]
        %v369 = vld [vmem:[%s325 + $0x81] sm:$0xff]
        %v370 = vld [vmem:[%s325 + $0x91] sm:$0xff]
        %v371 = vld [vmem:[%s325 + $0x99] sm:$0xff]
        %v372 = vld [vmem:[%s325 + $0xa9] sm:$0xff]
        %v373 = vld [vmem:[%s325 + $0xb1] sm:$0xff]
        %v374 = vld [vmem:[%s325 + $0xc1] sm:$0xff]
        %v375 = vld [vmem:[%s325 + $0xc9] sm:$0xff]
        %v376 = vld [vmem:[%s325 + $0xd9] sm:$0xff]
        %v377 = vld [vmem:[%s325 + $0xe1] sm:$0xff]
        %v378 = vld [vmem:[%s325 + $0xf1] sm:$0xff]
        %v379 = vld [vmem:[%s325 + $0xf9] sm:$0xff]
        %v380 = vld [vmem:[%s325 + $0x109] sm:$0xff]
        %v381 = vld [vmem:[%s325 + $0x111] sm:$0xff]
        %v382 = vld [vmem:[%s325 + $0x121] sm:$0xff]
        %v383 = vld [vmem:[%s325 + $0x129] sm:$0xff]
        %v384 = vld [vmem:[%s325 + $0x139] sm:$0xff]
        %v385 = vld [vmem:[%s325 + $0x141] sm:$0xff]
        %v386 = vld [vmem:[%s325 + $0x151] sm:$0xff]
        %v387 = vld [vmem:[%s325 + $0x159] sm:$0xff]
        %v388 = vld [vmem:[%s325 + $0x169] sm:$0xff]
        %v389 = vld [vmem:[%s325 + $0x171] sm:$0xff]
        %v390 = vld [vmem:[%s325 + $0x2] sm:$0xff]
        %v391 = vld [vmem:[%s325 + $0xa] sm:$0xff]
        %v392 = vld [vmem:[%s325 + $0x1a] sm:$0xff]
        %v393 = vld [vmem:[%s325 + $0x22] sm:$0xff]
        %v394 = vld [vmem:[%s325 + $0x32] sm:$0xff]
        %v395 = vld [vmem:[%s325 + $0x3a] sm:$0xff]
        %v396 = vld [vmem:[%s325 + $0x4a] sm:$0xff]
        %v397 = vld [vmem:[%s325 + $0x52] sm:$0xff]
        %v398 = vld [vmem:[%s325 + $0x62] sm:$0xff]
        %v399 = vld [vmem:[%s325 + $0x6a] sm:$0xff]
        %v400 = vld [vmem:[%s325 + $0x7a] sm:$0xff]
        %v401 = vld [vmem:[%s325 + $0x82] sm:$0xff]
        %v402 = vld [vmem:[%s325 + $0x92] sm:$0xff]
        %v403 = vld [vmem:[%s325 + $0x9a] sm:$0xff]
        %v404 = vld [vmem:[%s325 + $0xaa] sm:$0xff]
        %v405 = vld [vmem:[%s325 + $0xb2] sm:$0xff]
        %v406 = vld [vmem:[%s325 + $0xc2] sm:$0xff]
        %v407 = vld [vmem:[%s325 + $0xca] sm:$0xff]
        %v408 = vld [vmem:[%s325 + $0xda] sm:$0xff]
        %v409 = vld [vmem:[%s325 + $0xe2] sm:$0xff]
        %v410 = vld [vmem:[%s325 + $0xf2] sm:$0xff]
        %v411 = vld [vmem:[%s325 + $0xfa] sm:$0xff]
        %v412 = vld [vmem:[%s325 + $0x10a] sm:$0xff]
        %v413 = vld [vmem:[%s325 + $0x112] sm:$0xff]
        %v414 = vld [vmem:[%s325 + $0x122] sm:$0xff]
        %v415 = vld [vmem:[%s325 + $0x12a] sm:$0xff]
        %v416 = vld [vmem:[%s325 + $0x13a] sm:$0xff]
        %v417 = vld [vmem:[%s325 + $0x142] sm:$0xff]
        %v418 = vld [vmem:[%s325 + $0x152] sm:$0xff]
        %v419 = vld [vmem:[%s325 + $0x15a] sm:$0xff]
        %v420 = vld [vmem:[%s325 + $0x16a] sm:$0xff]
        %v421 = vld [vmem:[%s325 + $0x172] sm:$0xff]
        %s422 = sadd.s32 %s224, 2
        %s423 = smul.u32 %s422, 24
        %s424 = scalar_lea.vmem %s215, %s423
        %v425 = vld [vmem:[%s424] sm:$0xff]
        %v426 = vld [vmem:[%s424 + $0x8] sm:$0xff]
        %v427 = vld [vmem:[%s424 + $0x18] sm:$0xff]
        %v428 = vld [vmem:[%s424 + $0x20] sm:$0xff]
        %v429 = vld [vmem:[%s424 + $0x30] sm:$0xff]
        %v430 = vld [vmem:[%s424 + $0x38] sm:$0xff]
        %v431 = vld [vmem:[%s424 + $0x48] sm:$0xff]
        %v432 = vld [vmem:[%s424 + $0x50] sm:$0xff]
        %v433 = vld [vmem:[%s424 + $0x60] sm:$0xff]
        %v434 = vld [vmem:[%s424 + $0x68] sm:$0xff]
        %v435 = vld [vmem:[%s424 + $0x78] sm:$0xff]
        %v436 = vld [vmem:[%s424 + $0x80] sm:$0xff]
        %v437 = vld [vmem:[%s424 + $0x90] sm:$0xff]
        %v438 = vld [vmem:[%s424 + $0x98] sm:$0xff]
        %v439 = vld [vmem:[%s424 + $0xa8] sm:$0xff]
        %v440 = vld [vmem:[%s424 + $0xb0] sm:$0xff]
        %v441 = vld [vmem:[%s424 + $0xc0] sm:$0xff]
        %v442 = vld [vmem:[%s424 + $0xc8] sm:$0xff]
        %v443 = vld [vmem:[%s424 + $0xd8] sm:$0xff]
        %v444 = vld [vmem:[%s424 + $0xe0] sm:$0xff]
        %v445 = vld [vmem:[%s424 + $0xf0] sm:$0xff]
        %v446 = vld [vmem:[%s424 + $0xf8] sm:$0xff]
        %v447 = vld [vmem:[%s424 + $0x108] sm:$0xff]
        %v448 = vld [vmem:[%s424 + $0x110] sm:$0xff]
        %v449 = vld [vmem:[%s424 + $0x120] sm:$0xff]
        %v450 = vld [vmem:[%s424 + $0x128] sm:$0xff]
        %v451 = vld [vmem:[%s424 + $0x138] sm:$0xff]
        %v452 = vld [vmem:[%s424 + $0x140] sm:$0xff]
        %v453 = vld [vmem:[%s424 + $0x150] sm:$0xff]
        %v454 = vld [vmem:[%s424 + $0x158] sm:$0xff]
        %v455 = vld [vmem:[%s424 + $0x168] sm:$0xff]
        %v456 = vld [vmem:[%s424 + $0x170] sm:$0xff]
        %v457 = vld [vmem:[%s424 + $0x1] sm:$0xff]
        %v458 = vld [vmem:[%s424 + $0x9] sm:$0xff]
        %v459 = vld [vmem:[%s424 + $0x19] sm:$0xff]
        %v460 = vld [vmem:[%s424 + $0x21] sm:$0xff]
        %v461 = vld [vmem:[%s424 + $0x31] sm:$0xff]
        %v462 = vld [vmem:[%s424 + $0x39] sm:$0xff]
        %v463 = vld [vmem:[%s424 + $0x49] sm:$0xff]
        %v464 = vld [vmem:[%s424 + $0x51] sm:$0xff]
        %v465 = vld [vmem:[%s424 + $0x61] sm:$0xff]
        %v466 = vld [vmem:[%s424 + $0x69] sm:$0xff]
        %v467 = vld [vmem:[%s424 + $0x79] sm:$0xff]
        %v468 = vld [vmem:[%s424 + $0x81] sm:$0xff]
        %v469 = vld [vmem:[%s424 + $0x91] sm:$0xff]
        %v470 = vld [vmem:[%s424 + $0x99] sm:$0xff]
        %v471 = vld [vmem:[%s424 + $0xa9] sm:$0xff]
        %v472 = vld [vmem:[%s424 + $0xb1] sm:$0xff]
        %v473 = vld [vmem:[%s424 + $0xc1] sm:$0xff]
        %v474 = vld [vmem:[%s424 + $0xc9] sm:$0xff]
        %v475 = vld [vmem:[%s424 + $0xd9] sm:$0xff]
        %v476 = vld [vmem:[%s424 + $0xe1] sm:$0xff]
        %v477 = vld [vmem:[%s424 + $0xf1] sm:$0xff]
        %v478 = vld [vmem:[%s424 + $0xf9] sm:$0xff]
        %v479 = vld [vmem:[%s424 + $0x109] sm:$0xff]
        %v480 = vld [vmem:[%s424 + $0x111] sm:$0xff]
        %v481 = vld [vmem:[%s424 + $0x121] sm:$0xff]
        %v482 = vld [vmem:[%s424 + $0x129] sm:$0xff]
        %v483 = vld [vmem:[%s424 + $0x139] sm:$0xff]
        %v484 = vld [vmem:[%s424 + $0x141] sm:$0xff]
        %v485 = vld [vmem:[%s424 + $0x151] sm:$0xff]
        %v486 = vld [vmem:[%s424 + $0x159] sm:$0xff]
        %v487 = vld [vmem:[%s424 + $0x169] sm:$0xff]
        %v488 = vld [vmem:[%s424 + $0x171] sm:$0xff]
        %v489 = vld [vmem:[%s424 + $0x2] sm:$0xff]
        %v490 = vld [vmem:[%s424 + $0xa] sm:$0xff]
        %v491 = vld [vmem:[%s424 + $0x1a] sm:$0xff]
        %v492 = vld [vmem:[%s424 + $0x22] sm:$0xff]
        %v493 = vld [vmem:[%s424 + $0x32] sm:$0xff]
        %v494 = vld [vmem:[%s424 + $0x3a] sm:$0xff]
        %v495 = vld [vmem:[%s424 + $0x4a] sm:$0xff]
        %v496 = vld [vmem:[%s424 + $0x52] sm:$0xff]
        %v497 = vld [vmem:[%s424 + $0x62] sm:$0xff]
        %v498 = vld [vmem:[%s424 + $0x6a] sm:$0xff]
        %v499 = vld [vmem:[%s424 + $0x7a] sm:$0xff]
        %v500 = vld [vmem:[%s424 + $0x82] sm:$0xff]
        %v501 = vld [vmem:[%s424 + $0x92] sm:$0xff]
        %v502 = vld [vmem:[%s424 + $0x9a] sm:$0xff]
        %v503 = vld [vmem:[%s424 + $0xaa] sm:$0xff]
        %v504 = vld [vmem:[%s424 + $0xb2] sm:$0xff]
        %v505 = vld [vmem:[%s424 + $0xc2] sm:$0xff]
        %v506 = vld [vmem:[%s424 + $0xca] sm:$0xff]
        %v507 = vld [vmem:[%s424 + $0xda] sm:$0xff]
        %v508 = vld [vmem:[%s424 + $0xe2] sm:$0xff]
        %v509 = vld [vmem:[%s424 + $0xf2] sm:$0xff]
        %v510 = vld [vmem:[%s424 + $0xfa] sm:$0xff]
        %v511 = vld [vmem:[%s424 + $0x10a] sm:$0xff]
        %v512 = vld [vmem:[%s424 + $0x112] sm:$0xff]
        %v513 = vld [vmem:[%s424 + $0x122] sm:$0xff]
        %v514 = vld [vmem:[%s424 + $0x12a] sm:$0xff]
        %v515 = vld [vmem:[%s424 + $0x13a] sm:$0xff]
        %v516 = vld [vmem:[%s424 + $0x142] sm:$0xff]
        %v517 = vld [vmem:[%s424 + $0x152] sm:$0xff]
        %v518 = vld [vmem:[%s424 + $0x15a] sm:$0xff]
        %v519 = vld [vmem:[%s424 + $0x16a] sm:$0xff]
        %v520 = vld [vmem:[%s424 + $0x172] sm:$0xff]
        %553 = vrot.lane.b32.xlu0 %v259, 4
        %v554 = vpop.permute.xlu0 %553
        %555 = vrot.lane.b32.xlu0 %v260, 4
        %v556 = vpop.permute.xlu0 %555
        %557 = vrot.lane.b32.xlu0 %v261, 4
        %v558 = vpop.permute.xlu0 %557
        %559 = vrot.lane.b32.xlu0 %v262, 4
        %v560 = vpop.permute.xlu0 %559
        %561 = vrot.lane.b32.xlu0 %v263, 4
        %v562 = vpop.permute.xlu0 %561
        %563 = vrot.lane.b32.xlu0 %v264, 4
        %v564 = vpop.permute.xlu0 %563
        %565 = vrot.lane.b32.xlu0 %v265, 4
        %v566 = vpop.permute.xlu0 %565
        %567 = vrot.lane.b32.xlu0 %v266, 4
        %v568 = vpop.permute.xlu0 %567
        %569 = vrot.lane.b32.xlu0 %v267, 4
        %v570 = vpop.permute.xlu0 %569
        %571 = vrot.lane.b32.xlu0 %v268, 4
        %v572 = vpop.permute.xlu0 %571
        %573 = vrot.lane.b32.xlu0 %v269, 4
        %v574 = vpop.permute.xlu0 %573
        %575 = vrot.lane.b32.xlu0 %v270, 4
        %v576 = vpop.permute.xlu0 %575
        %577 = vrot.lane.b32.xlu0 %v271, 4
        %v578 = vpop.permute.xlu0 %577
        %579 = vrot.lane.b32.xlu0 %v272, 4
        %v580 = vpop.permute.xlu0 %579
        %581 = vrot.lane.b32.xlu0 %v273, 4
        %v582 = vpop.permute.xlu0 %581
        %583 = vrot.lane.b32.xlu0 %v274, 4
        %v584 = vpop.permute.xlu0 %583
        %585 = vrot.lane.b32.xlu0 %v275, 4
        %v586 = vpop.permute.xlu0 %585
        %587 = vrot.lane.b32.xlu0 %v276, 4
        %v588 = vpop.permute.xlu0 %587
        %589 = vrot.lane.b32.xlu0 %v277, 4
        %v590 = vpop.permute.xlu0 %589
        %591 = vrot.lane.b32.xlu0 %v278, 4
        %v592 = vpop.permute.xlu0 %591
        %593 = vrot.lane.b32.xlu0 %v279, 4
        %v594 = vpop.permute.xlu0 %593
        %595 = vrot.lane.b32.xlu0 %v280, 4
        %v596 = vpop.permute.xlu0 %595
        %597 = vrot.lane.b32.xlu0 %v281, 4
        %v598 = vpop.permute.xlu0 %597
        %599 = vrot.lane.b32.xlu0 %v282, 4
        %v600 = vpop.permute.xlu0 %599
        %601 = vrot.lane.b32.xlu0 %v283, 4
        %v602 = vpop.permute.xlu0 %601
        %603 = vrot.lane.b32.xlu0 %v284, 4
        %v604 = vpop.permute.xlu0 %603
        %605 = vrot.lane.b32.xlu0 %v285, 4
        %v606 = vpop.permute.xlu0 %605
        %607 = vrot.lane.b32.xlu0 %v286, 4
        %v608 = vpop.permute.xlu0 %607
        %609 = vrot.lane.b32.xlu0 %v287, 4
        %v610 = vpop.permute.xlu0 %609
        %611 = vrot.lane.b32.xlu0 %v288, 4
        %v612 = vpop.permute.xlu0 %611
        %613 = vrot.lane.b32.xlu0 %v289, 4
        %v614 = vpop.permute.xlu0 %613
        %615 = vrot.lane.b32.xlu0 %v290, 4
        %v616 = vpop.permute.xlu0 %615
        %681 = vrot.lane.b32.xlu0 %v291, 8
        %v682 = vpop.permute.xlu0 %681
        %683 = vrot.lane.b32.xlu0 %v292, 8
        %v684 = vpop.permute.xlu0 %683
        %685 = vrot.lane.b32.xlu0 %v293, 8
        %v686 = vpop.permute.xlu0 %685
        %687 = vrot.lane.b32.xlu0 %v294, 8
        %v688 = vpop.permute.xlu0 %687
        %689 = vrot.lane.b32.xlu0 %v295, 8
        %v690 = vpop.permute.xlu0 %689
        %691 = vrot.lane.b32.xlu0 %v296, 8
        %v692 = vpop.permute.xlu0 %691
        %693 = vrot.lane.b32.xlu0 %v297, 8
        %v694 = vpop.permute.xlu0 %693
        %695 = vrot.lane.b32.xlu0 %v298, 8
        %v696 = vpop.permute.xlu0 %695
        %697 = vrot.lane.b32.xlu0 %v299, 8
        %v698 = vpop.permute.xlu0 %697
        %699 = vrot.lane.b32.xlu0 %v300, 8
        %v700 = vpop.permute.xlu0 %699
        %701 = vrot.lane.b32.xlu0 %v301, 8
        %v702 = vpop.permute.xlu0 %701
        %703 = vrot.lane.b32.xlu0 %v302, 8
        %v704 = vpop.permute.xlu0 %703
        %705 = vrot.lane.b32.xlu0 %v303, 8
        %v706 = vpop.permute.xlu0 %705
        %707 = vrot.lane.b32.xlu0 %v304, 8
        %v708 = vpop.permute.xlu0 %707
        %709 = vrot.lane.b32.xlu0 %v305, 8
        %v710 = vpop.permute.xlu0 %709
        %711 = vrot.lane.b32.xlu0 %v306, 8
        %v712 = vpop.permute.xlu0 %711
        %713 = vrot.lane.b32.xlu0 %v307, 8
        %v714 = vpop.permute.xlu0 %713
        %715 = vrot.lane.b32.xlu0 %v308, 8
        %v716 = vpop.permute.xlu0 %715
        %717 = vrot.lane.b32.xlu0 %v309, 8
        %v718 = vpop.permute.xlu0 %717
        %719 = vrot.lane.b32.xlu0 %v310, 8
        %v720 = vpop.permute.xlu0 %719
        %721 = vrot.lane.b32.xlu0 %v311, 8
        %v722 = vpop.permute.xlu0 %721
        %723 = vrot.lane.b32.xlu0 %v312, 8
        %v724 = vpop.permute.xlu0 %723
        %725 = vrot.lane.b32.xlu0 %v313, 8
        %v726 = vpop.permute.xlu0 %725
        %727 = vrot.lane.b32.xlu0 %v314, 8
        %v728 = vpop.permute.xlu0 %727
        %729 = vrot.lane.b32.xlu0 %v315, 8
        %v730 = vpop.permute.xlu0 %729
        %731 = vrot.lane.b32.xlu0 %v316, 8
        %v732 = vpop.permute.xlu0 %731
        %733 = vrot.lane.b32.xlu0 %v317, 8
        %v734 = vpop.permute.xlu0 %733
        %735 = vrot.lane.b32.xlu0 %v318, 8
        %v736 = vpop.permute.xlu0 %735
        %737 = vrot.lane.b32.xlu0 %v319, 8
        %v738 = vpop.permute.xlu0 %737
        %739 = vrot.lane.b32.xlu0 %v320, 8
        %v740 = vpop.permute.xlu0 %739
        %741 = vrot.lane.b32.xlu0 %v321, 8
        %v742 = vpop.permute.xlu0 %741
        %743 = vrot.lane.b32.xlu0 %v322, 8
        %v744 = vpop.permute.xlu0 %743
        %809 = vrot.lane.b32.xlu0 %v326, 12
        %v810 = vpop.permute.xlu0 %809
        %811 = vrot.lane.b32.xlu0 %v327, 12
        %v812 = vpop.permute.xlu0 %811
        %813 = vrot.lane.b32.xlu0 %v328, 12
        %v814 = vpop.permute.xlu0 %813
        %815 = vrot.lane.b32.xlu0 %v329, 12
        %v816 = vpop.permute.xlu0 %815
        %817 = vrot.lane.b32.xlu0 %v330, 12
        %v818 = vpop.permute.xlu0 %817
        %819 = vrot.lane.b32.xlu0 %v331, 12
        %v820 = vpop.permute.xlu0 %819
        %821 = vrot.lane.b32.xlu0 %v332, 12
        %v822 = vpop.permute.xlu0 %821
        %823 = vrot.lane.b32.xlu0 %v333, 12
        %v824 = vpop.permute.xlu0 %823
        %825 = vrot.lane.b32.xlu0 %v334, 12
        %v826 = vpop.permute.xlu0 %825
        %827 = vrot.lane.b32.xlu0 %v335, 12
        %v828 = vpop.permute.xlu0 %827
        %829 = vrot.lane.b32.xlu0 %v336, 12
        %v830 = vpop.permute.xlu0 %829
        %831 = vrot.lane.b32.xlu0 %v337, 12
        %v832 = vpop.permute.xlu0 %831
        %833 = vrot.lane.b32.xlu0 %v338, 12
        %v834 = vpop.permute.xlu0 %833
        %835 = vrot.lane.b32.xlu0 %v339, 12
        %v836 = vpop.permute.xlu0 %835
        %837 = vrot.lane.b32.xlu0 %v340, 12
        %v838 = vpop.permute.xlu0 %837
        %839 = vrot.lane.b32.xlu0 %v341, 12
        %v840 = vpop.permute.xlu0 %839
        %841 = vrot.lane.b32.xlu0 %v342, 12
        %v842 = vpop.permute.xlu0 %841
        %843 = vrot.lane.b32.xlu0 %v343, 12
        %v844 = vpop.permute.xlu0 %843
        %845 = vrot.lane.b32.xlu0 %v344, 12
        %v846 = vpop.permute.xlu0 %845
        %847 = vrot.lane.b32.xlu0 %v345, 12
        %v848 = vpop.permute.xlu0 %847
        %849 = vrot.lane.b32.xlu0 %v346, 12
        %v850 = vpop.permute.xlu0 %849
        %851 = vrot.lane.b32.xlu0 %v347, 12
        %v852 = vpop.permute.xlu0 %851
        %853 = vrot.lane.b32.xlu0 %v348, 12
        %v854 = vpop.permute.xlu0 %853
        %855 = vrot.lane.b32.xlu0 %v349, 12
        %v856 = vpop.permute.xlu0 %855
        %857 = vrot.lane.b32.xlu0 %v350, 12
        %v858 = vpop.permute.xlu0 %857
        %859 = vrot.lane.b32.xlu0 %v351, 12
        %v860 = vpop.permute.xlu0 %859
        %861 = vrot.lane.b32.xlu0 %v352, 12
        %v862 = vpop.permute.xlu0 %861
        %863 = vrot.lane.b32.xlu0 %v353, 12
        %v864 = vpop.permute.xlu0 %863
        %865 = vrot.lane.b32.xlu0 %v354, 12
        %v866 = vpop.permute.xlu0 %865
        %867 = vrot.lane.b32.xlu0 %v355, 12
        %v868 = vpop.permute.xlu0 %867
        %869 = vrot.lane.b32.xlu0 %v356, 12
        %v870 = vpop.permute.xlu0 %869
        %871 = vrot.lane.b32.xlu0 %v357, 12
        %v872 = vpop.permute.xlu0 %871
        %937 = vrot.lane.b32.xlu0 %v358, 16
        %v938 = vpop.permute.xlu0 %937
        %939 = vrot.lane.b32.xlu0 %v359, 16
        %v940 = vpop.permute.xlu0 %939
        %941 = vrot.lane.b32.xlu0 %v360, 16
        %v942 = vpop.permute.xlu0 %941
        %943 = vrot.lane.b32.xlu0 %v361, 16
        %v944 = vpop.permute.xlu0 %943
        %945 = vrot.lane.b32.xlu0 %v362, 16
        %v946 = vpop.permute.xlu0 %945
        %947 = vrot.lane.b32.xlu0 %v363, 16
        %v948 = vpop.permute.xlu0 %947
        %949 = vrot.lane.b32.xlu0 %v364, 16
        %v950 = vpop.permute.xlu0 %949
        %951 = vrot.lane.b32.xlu0 %v365, 16
        %v952 = vpop.permute.xlu0 %951
        %953 = vrot.lane.b32.xlu0 %v366, 16
        %v954 = vpop.permute.xlu0 %953
        %955 = vrot.lane.b32.xlu0 %v367, 16
        %v956 = vpop.permute.xlu0 %955
        %957 = vrot.lane.b32.xlu0 %v368, 16
        %v958 = vpop.permute.xlu0 %957
        %959 = vrot.lane.b32.xlu0 %v369, 16
        %v960 = vpop.permute.xlu0 %959
        %961 = vrot.lane.b32.xlu0 %v370, 16
        %v962 = vpop.permute.xlu0 %961
        %963 = vrot.lane.b32.xlu0 %v371, 16
        %v964 = vpop.permute.xlu0 %963
        %965 = vrot.lane.b32.xlu0 %v372, 16
        %v966 = vpop.permute.xlu0 %965
        %967 = vrot.lane.b32.xlu0 %v373, 16
        %v968 = vpop.permute.xlu0 %967
        %969 = vrot.lane.b32.xlu0 %v374, 16
        %v970 = vpop.permute.xlu0 %969
        %971 = vrot.lane.b32.xlu0 %v375, 16
        %v972 = vpop.permute.xlu0 %971
        %973 = vrot.lane.b32.xlu0 %v376, 16
        %v974 = vpop.permute.xlu0 %973
        %975 = vrot.lane.b32.xlu0 %v377, 16
        %v976 = vpop.permute.xlu0 %975
        %977 = vrot.lane.b32.xlu0 %v378, 16
        %v978 = vpop.permute.xlu0 %977
        %979 = vrot.lane.b32.xlu0 %v379, 16
        %v980 = vpop.permute.xlu0 %979
        %981 = vrot.lane.b32.xlu0 %v380, 16
        %v982 = vpop.permute.xlu0 %981
        %983 = vrot.lane.b32.xlu0 %v381, 16
        %v984 = vpop.permute.xlu0 %983
        %985 = vrot.lane.b32.xlu0 %v382, 16
        %v986 = vpop.permute.xlu0 %985
        %987 = vrot.lane.b32.xlu0 %v383, 16
        %v988 = vpop.permute.xlu0 %987
        %989 = vrot.lane.b32.xlu0 %v384, 16
        %v990 = vpop.permute.xlu0 %989
        %991 = vrot.lane.b32.xlu0 %v385, 16
        %v992 = vpop.permute.xlu0 %991
        %993 = vrot.lane.b32.xlu0 %v386, 16
        %v994 = vpop.permute.xlu0 %993
        %995 = vrot.lane.b32.xlu0 %v387, 16
        %v996 = vpop.permute.xlu0 %995
        %997 = vrot.lane.b32.xlu0 %v388, 16
        %v998 = vpop.permute.xlu0 %997
        %999 = vrot.lane.b32.xlu0 %v389, 16
        %v1000 = vpop.permute.xlu0 %999
        %1065 = vrot.lane.b32.xlu0 %v390, 20
        %v1066 = vpop.permute.xlu0 %1065
        %1067 = vrot.lane.b32.xlu0 %v391, 20
        %v1068 = vpop.permute.xlu0 %1067
        %1069 = vrot.lane.b32.xlu0 %v392, 20
        %v1070 = vpop.permute.xlu0 %1069
        %1071 = vrot.lane.b32.xlu0 %v393, 20
        %v1072 = vpop.permute.xlu0 %1071
        %1073 = vrot.lane.b32.xlu0 %v394, 20
        %v1074 = vpop.permute.xlu0 %1073
        %1075 = vrot.lane.b32.xlu0 %v395, 20
        %v1076 = vpop.permute.xlu0 %1075
        %1077 = vrot.lane.b32.xlu0 %v396, 20
        %v1078 = vpop.permute.xlu0 %1077
        %1079 = vrot.lane.b32.xlu0 %v397, 20
        %v1080 = vpop.permute.xlu0 %1079
        %1081 = vrot.lane.b32.xlu0 %v398, 20
        %v1082 = vpop.permute.xlu0 %1081
        %1083 = vrot.lane.b32.xlu0 %v399, 20
        %v1084 = vpop.permute.xlu0 %1083
        %1085 = vrot.lane.b32.xlu0 %v400, 20
        %v1086 = vpop.permute.xlu0 %1085
        %1087 = vrot.lane.b32.xlu0 %v401, 20
        %v1088 = vpop.permute.xlu0 %1087
        %1089 = vrot.lane.b32.xlu0 %v402, 20
        %v1090 = vpop.permute.xlu0 %1089
        %1091 = vrot.lane.b32.xlu0 %v403, 20
        %v1092 = vpop.permute.xlu0 %1091
        %1093 = vrot.lane.b32.xlu0 %v404, 20
        %v1094 = vpop.permute.xlu0 %1093
        %1095 = vrot.lane.b32.xlu0 %v405, 20
        %v1096 = vpop.permute.xlu0 %1095
        %1097 = vrot.lane.b32.xlu0 %v406, 20
        %v1098 = vpop.permute.xlu0 %1097
        %1099 = vrot.lane.b32.xlu0 %v407, 20
        %v1100 = vpop.permute.xlu0 %1099
        %1101 = vrot.lane.b32.xlu0 %v408, 20
        %v1102 = vpop.permute.xlu0 %1101
        %1103 = vrot.lane.b32.xlu0 %v409, 20
        %v1104 = vpop.permute.xlu0 %1103
        %1105 = vrot.lane.b32.xlu0 %v410, 20
        %v1106 = vpop.permute.xlu0 %1105
        %1107 = vrot.lane.b32.xlu0 %v411, 20
        %v1108 = vpop.permute.xlu0 %1107
        %1109 = vrot.lane.b32.xlu0 %v412, 20
        %v1110 = vpop.permute.xlu0 %1109
        %1111 = vrot.lane.b32.xlu0 %v413, 20
        %v1112 = vpop.permute.xlu0 %1111
        %1113 = vrot.lane.b32.xlu0 %v414, 20
        %v1114 = vpop.permute.xlu0 %1113
        %1115 = vrot.lane.b32.xlu0 %v415, 20
        %v1116 = vpop.permute.xlu0 %1115
        %1117 = vrot.lane.b32.xlu0 %v416, 20
        %v1118 = vpop.permute.xlu0 %1117
        %1119 = vrot.lane.b32.xlu0 %v417, 20
        %v1120 = vpop.permute.xlu0 %1119
        %1121 = vrot.lane.b32.xlu0 %v418, 20
        %v1122 = vpop.permute.xlu0 %1121
        %1123 = vrot.lane.b32.xlu0 %v419, 20
        %v1124 = vpop.permute.xlu0 %1123
        %1125 = vrot.lane.b32.xlu0 %v420, 20
        %v1126 = vpop.permute.xlu0 %1125
        %1127 = vrot.lane.b32.xlu0 %v421, 20
        %v1128 = vpop.permute.xlu0 %1127
        %1193 = vrot.lane.b32.xlu0 %v425, 24
        %v1194 = vpop.permute.xlu0 %1193
        %1195 = vrot.lane.b32.xlu0 %v426, 24
        %v1196 = vpop.permute.xlu0 %1195
        %1197 = vrot.lane.b32.xlu0 %v427, 24
        %v1198 = vpop.permute.xlu0 %1197
        %1199 = vrot.lane.b32.xlu0 %v428, 24
        %v1200 = vpop.permute.xlu0 %1199
        %1201 = vrot.lane.b32.xlu0 %v429, 24
        %v1202 = vpop.permute.xlu0 %1201
        %1203 = vrot.lane.b32.xlu0 %v430, 24
        %v1204 = vpop.permute.xlu0 %1203
        %1205 = vrot.lane.b32.xlu0 %v431, 24
        %v1206 = vpop.permute.xlu0 %1205
        %1207 = vrot.lane.b32.xlu0 %v432, 24
        %v1208 = vpop.permute.xlu0 %1207
        %1209 = vrot.lane.b32.xlu0 %v433, 24
        %v1210 = vpop.permute.xlu0 %1209
        %1211 = vrot.lane.b32.xlu0 %v434, 24
        %v1212 = vpop.permute.xlu0 %1211
        %1213 = vrot.lane.b32.xlu0 %v435, 24
        %v1214 = vpop.permute.xlu0 %1213
        %1215 = vrot.lane.b32.xlu0 %v436, 24
        %v1216 = vpop.permute.xlu0 %1215
        %1217 = vrot.lane.b32.xlu0 %v437, 24
        %v1218 = vpop.permute.xlu0 %1217
        %1219 = vrot.lane.b32.xlu0 %v438, 24
        %v1220 = vpop.permute.xlu0 %1219
        %1221 = vrot.lane.b32.xlu0 %v439, 24
        %v1222 = vpop.permute.xlu0 %1221
        %1223 = vrot.lane.b32.xlu0 %v440, 24
        %v1224 = vpop.permute.xlu0 %1223
        %1225 = vrot.lane.b32.xlu0 %v441, 24
        %v1226 = vpop.permute.xlu0 %1225
        %1227 = vrot.lane.b32.xlu0 %v442, 24
        %v1228 = vpop.permute.xlu0 %1227
        %1229 = vrot.lane.b32.xlu0 %v443, 24
        %v1230 = vpop.permute.xlu0 %1229
        %1231 = vrot.lane.b32.xlu0 %v444, 24
        %v1232 = vpop.permute.xlu0 %1231
        %1233 = vrot.lane.b32.xlu0 %v445, 24
        %v1234 = vpop.permute.xlu0 %1233
        %1235 = vrot.lane.b32.xlu0 %v446, 24
        %v1236 = vpop.permute.xlu0 %1235
        %1237 = vrot.lane.b32.xlu0 %v447, 24
        %v1238 = vpop.permute.xlu0 %1237
        %1239 = vrot.lane.b32.xlu0 %v448, 24
        %v1240 = vpop.permute.xlu0 %1239
        %1241 = vrot.lane.b32.xlu0 %v449, 24
        %v1242 = vpop.permute.xlu0 %1241
        %1243 = vrot.lane.b32.xlu0 %v450, 24
        %v1244 = vpop.permute.xlu0 %1243
        %1245 = vrot.lane.b32.xlu0 %v451, 24
        %v1246 = vpop.permute.xlu0 %1245
        %1247 = vrot.lane.b32.xlu0 %v452, 24
        %v1248 = vpop.permute.xlu0 %1247
        %1249 = vrot.lane.b32.xlu0 %v453, 24
        %v1250 = vpop.permute.xlu0 %1249
        %1251 = vrot.lane.b32.xlu0 %v454, 24
        %v1252 = vpop.permute.xlu0 %1251
        %1253 = vrot.lane.b32.xlu0 %v455, 24
        %v1254 = vpop.permute.xlu0 %1253
        %1255 = vrot.lane.b32.xlu0 %v456, 24
        %v1256 = vpop.permute.xlu0 %1255
        %1321 = vrot.lane.b32.xlu0 %v457, 28
        %v1322 = vpop.permute.xlu0 %1321
        %1323 = vrot.lane.b32.xlu0 %v458, 28
        %v1324 = vpop.permute.xlu0 %1323
        %1325 = vrot.lane.b32.xlu0 %v459, 28
        %v1326 = vpop.permute.xlu0 %1325
        %1327 = vrot.lane.b32.xlu0 %v460, 28
        %v1328 = vpop.permute.xlu0 %1327
        %1329 = vrot.lane.b32.xlu0 %v461, 28
        %v1330 = vpop.permute.xlu0 %1329
        %1331 = vrot.lane.b32.xlu0 %v462, 28
        %v1332 = vpop.permute.xlu0 %1331
        %1333 = vrot.lane.b32.xlu0 %v463, 28
        %v1334 = vpop.permute.xlu0 %1333
        %1335 = vrot.lane.b32.xlu0 %v464, 28
        %v1336 = vpop.permute.xlu0 %1335
        %1337 = vrot.lane.b32.xlu0 %v465, 28
        %v1338 = vpop.permute.xlu0 %1337
        %1339 = vrot.lane.b32.xlu0 %v466, 28
        %v1340 = vpop.permute.xlu0 %1339
        %1341 = vrot.lane.b32.xlu0 %v467, 28
        %v1342 = vpop.permute.xlu0 %1341
        %1343 = vrot.lane.b32.xlu0 %v468, 28
        %v1344 = vpop.permute.xlu0 %1343
        %1345 = vrot.lane.b32.xlu0 %v469, 28
        %v1346 = vpop.permute.xlu0 %1345
        %1347 = vrot.lane.b32.xlu0 %v470, 28
        %v1348 = vpop.permute.xlu0 %1347
        %1349 = vrot.lane.b32.xlu0 %v471, 28
        %v1350 = vpop.permute.xlu0 %1349
        %1351 = vrot.lane.b32.xlu0 %v472, 28
        %v1352 = vpop.permute.xlu0 %1351
        %1353 = vrot.lane.b32.xlu0 %v473, 28
        %v1354 = vpop.permute.xlu0 %1353
        %1355 = vrot.lane.b32.xlu0 %v474, 28
        %v1356 = vpop.permute.xlu0 %1355
        %1357 = vrot.lane.b32.xlu0 %v475, 28
        %v1358 = vpop.permute.xlu0 %1357
        %1359 = vrot.lane.b32.xlu0 %v476, 28
        %v1360 = vpop.permute.xlu0 %1359
        %1361 = vrot.lane.b32.xlu0 %v477, 28
        %v1362 = vpop.permute.xlu0 %1361
        %1363 = vrot.lane.b32.xlu0 %v478, 28
        %v1364 = vpop.permute.xlu0 %1363
        %1365 = vrot.lane.b32.xlu0 %v479, 28
        %v1366 = vpop.permute.xlu0 %1365
        %1367 = vrot.lane.b32.xlu0 %v480, 28
        %v1368 = vpop.permute.xlu0 %1367
        %1369 = vrot.lane.b32.xlu0 %v481, 28
        %v1370 = vpop.permute.xlu0 %1369
        %1371 = vrot.lane.b32.xlu0 %v482, 28
        %v1372 = vpop.permute.xlu0 %1371
        %1373 = vrot.lane.b32.xlu0 %v483, 28
        %v1374 = vpop.permute.xlu0 %1373
        %1375 = vrot.lane.b32.xlu0 %v484, 28
        %v1376 = vpop.permute.xlu0 %1375
        %1377 = vrot.lane.b32.xlu0 %v485, 28
        %v1378 = vpop.permute.xlu0 %1377
        %1379 = vrot.lane.b32.xlu0 %v486, 28
        %v1380 = vpop.permute.xlu0 %1379
        %1381 = vrot.lane.b32.xlu0 %v487, 28
        %v1382 = vpop.permute.xlu0 %1381
        %1383 = vrot.lane.b32.xlu0 %v488, 28
        %v1384 = vpop.permute.xlu0 %1383
        %1449 = vrot.lane.b32.xlu0 %v489, 32
        %v1450 = vpop.permute.xlu0 %1449
        %1451 = vrot.lane.b32.xlu0 %v490, 32
        %v1452 = vpop.permute.xlu0 %1451
        %1453 = vrot.lane.b32.xlu0 %v491, 32
        %v1454 = vpop.permute.xlu0 %1453
        %1455 = vrot.lane.b32.xlu0 %v492, 32
        %v1456 = vpop.permute.xlu0 %1455
        %1457 = vrot.lane.b32.xlu0 %v493, 32
        %v1458 = vpop.permute.xlu0 %1457
        %1459 = vrot.lane.b32.xlu0 %v494, 32
        %v1460 = vpop.permute.xlu0 %1459
        %1461 = vrot.lane.b32.xlu0 %v495, 32
        %v1462 = vpop.permute.xlu0 %1461
        %1463 = vrot.lane.b32.xlu0 %v496, 32
        %v1464 = vpop.permute.xlu0 %1463
        %1465 = vrot.lane.b32.xlu0 %v497, 32
        %v1466 = vpop.permute.xlu0 %1465
        %1467 = vrot.lane.b32.xlu0 %v498, 32
        %v1468 = vpop.permute.xlu0 %1467
        %1469 = vrot.lane.b32.xlu0 %v499, 32
        %v1470 = vpop.permute.xlu0 %1469
        %1471 = vrot.lane.b32.xlu0 %v500, 32
        %v1472 = vpop.permute.xlu0 %1471
        %1473 = vrot.lane.b32.xlu0 %v501, 32
        %v1474 = vpop.permute.xlu0 %1473
        %1475 = vrot.lane.b32.xlu0 %v502, 32
        %v1476 = vpop.permute.xlu0 %1475
        %1477 = vrot.lane.b32.xlu0 %v503, 32
        %v1478 = vpop.permute.xlu0 %1477
        %1479 = vrot.lane.b32.xlu0 %v504, 32
        %v1480 = vpop.permute.xlu0 %1479
        %1481 = vrot.lane.b32.xlu0 %v505, 32
        %v1482 = vpop.permute.xlu0 %1481
        %1483 = vrot.lane.b32.xlu0 %v506, 32
        %v1484 = vpop.permute.xlu0 %1483
        %1485 = vrot.lane.b32.xlu0 %v507, 32
        %v1486 = vpop.permute.xlu0 %1485
        %1487 = vrot.lane.b32.xlu0 %v508, 32
        %v1488 = vpop.permute.xlu0 %1487
        %1489 = vrot.lane.b32.xlu0 %v509, 32
        %v1490 = vpop.permute.xlu0 %1489
        %1491 = vrot.lane.b32.xlu0 %v510, 32
        %v1492 = vpop.permute.xlu0 %1491
        %1493 = vrot.lane.b32.xlu0 %v511, 32
        %v1494 = vpop.permute.xlu0 %1493
        %1495 = vrot.lane.b32.xlu0 %v512, 32
        %v1496 = vpop.permute.xlu0 %1495
        %1497 = vrot.lane.b32.xlu0 %v513, 32
        %v1498 = vpop.permute.xlu0 %1497
        %1499 = vrot.lane.b32.xlu0 %v514, 32
        %v1500 = vpop.permute.xlu0 %1499
        %1501 = vrot.lane.b32.xlu0 %v515, 32
        %v1502 = vpop.permute.xlu0 %1501
        %1503 = vrot.lane.b32.xlu0 %v516, 32
        %v1504 = vpop.permute.xlu0 %1503
        %1505 = vrot.lane.b32.xlu0 %v517, 32
        %v1506 = vpop.permute.xlu0 %1505
        %1507 = vrot.lane.b32.xlu0 %v518, 32
        %v1508 = vpop.permute.xlu0 %1507
        %1509 = vrot.lane.b32.xlu0 %v519, 32
        %v1510 = vpop.permute.xlu0 %1509
        %1511 = vrot.lane.b32.xlu0 %v520, 32
        %v1512 = vpop.permute.xlu0 %1511
        %vm1545 = vcmask 31744
        %v1546 = vsel %vm1545, %v227, %v554
        %v1547 = vsel %vm1545, %v228, %v556
        %v1548 = vsel %vm1545, %v229, %v558
        %v1549 = vsel %vm1545, %v230, %v560
        %v1550 = vsel %vm1545, %v231, %v562
        %v1551 = vsel %vm1545, %v232, %v564
        %v1552 = vsel %vm1545, %v233, %v566
        %v1553 = vsel %vm1545, %v234, %v568
        %v1554 = vsel %vm1545, %v235, %v570
        %v1555 = vsel %vm1545, %v236, %v572
        %v1556 = vsel %vm1545, %v237, %v574
        %v1557 = vsel %vm1545, %v238, %v576
        %v1558 = vsel %vm1545, %v239, %v578
        %v1559 = vsel %vm1545, %v240, %v580
        %v1560 = vsel %vm1545, %v241, %v582
        %v1561 = vsel %vm1545, %v242, %v584
        %v1562 = vsel %vm1545, %v243, %v586
        %v1563 = vsel %vm1545, %v244, %v588
        %v1564 = vsel %vm1545, %v245, %v590
        %v1565 = vsel %vm1545, %v246, %v592
        %v1566 = vsel %vm1545, %v247, %v594
        %v1567 = vsel %vm1545, %v248, %v596
        %v1568 = vsel %vm1545, %v249, %v598
        %v1569 = vsel %vm1545, %v250, %v600
        %v1570 = vsel %vm1545, %v251, %v602
        %v1571 = vsel %vm1545, %v252, %v604
        %v1572 = vsel %vm1545, %v253, %v606
        %v1573 = vsel %vm1545, %v254, %v608
        %v1574 = vsel %vm1545, %v255, %v610
        %v1575 = vsel %vm1545, %v256, %v612
        %v1576 = vsel %vm1545, %v257, %v614
        %v1577 = vsel %vm1545, %v258, %v616
        %vm1578 = vcmask 64512
        %v1579 = vsel %vm1578, %v1546, %v682
        %v1580 = vsel %vm1578, %v1547, %v684
        %v1581 = vsel %vm1578, %v1548, %v686
        %v1582 = vsel %vm1578, %v1549, %v688
        %v1583 = vsel %vm1578, %v1550, %v690
        %v1584 = vsel %vm1578, %v1551, %v692
        %v1585 = vsel %vm1578, %v1552, %v694
        %v1586 = vsel %vm1578, %v1553, %v696
        %v1587 = vsel %vm1578, %v1554, %v698
        %v1588 = vsel %vm1578, %v1555, %v700
        %v1589 = vsel %vm1578, %v1556, %v702
        %v1590 = vsel %vm1578, %v1557, %v704
        %v1591 = vsel %vm1578, %v1558, %v706
        %v1592 = vsel %vm1578, %v1559, %v708
        %v1593 = vsel %vm1578, %v1560, %v710
        %v1594 = vsel %vm1578, %v1561, %v712
        %v1595 = vsel %vm1578, %v1562, %v714
        %v1596 = vsel %vm1578, %v1563, %v716
        %v1597 = vsel %vm1578, %v1564, %v718
        %v1598 = vsel %vm1578, %v1565, %v720
        %v1599 = vsel %vm1578, %v1566, %v722
        %v1600 = vsel %vm1578, %v1567, %v724
        %v1601 = vsel %vm1578, %v1568, %v726
        %v1602 = vsel %vm1578, %v1569, %v728
        %v1603 = vsel %vm1578, %v1570, %v730
        %v1604 = vsel %vm1578, %v1571, %v732
        %v1605 = vsel %vm1578, %v1572, %v734
        %v1606 = vsel %vm1578, %v1573, %v736
        %v1607 = vsel %vm1578, %v1574, %v738
        %v1608 = vsel %vm1578, %v1575, %v740
        %v1609 = vsel %vm1578, %v1576, %v742
        %v1610 = vsel %vm1578, %v1577, %v744
        %vm1611 = vcmask 97280
        %v1612 = vsel %vm1611, %v1579, %v810
        %v1613 = vsel %vm1611, %v1580, %v812
        %v1614 = vsel %vm1611, %v1581, %v814
        %v1615 = vsel %vm1611, %v1582, %v816
        %v1616 = vsel %vm1611, %v1583, %v818
        %v1617 = vsel %vm1611, %v1584, %v820
        %v1618 = vsel %vm1611, %v1585, %v822
        %v1619 = vsel %vm1611, %v1586, %v824
        %v1620 = vsel %vm1611, %v1587, %v826
        %v1621 = vsel %vm1611, %v1588, %v828
        %v1622 = vsel %vm1611, %v1589, %v830
        %v1623 = vsel %vm1611, %v1590, %v832
        %v1624 = vsel %vm1611, %v1591, %v834
        %v1625 = vsel %vm1611, %v1592, %v836
        %v1626 = vsel %vm1611, %v1593, %v838
        %v1627 = vsel %vm1611, %v1594, %v840
        %v1628 = vsel %vm1611, %v1595, %v842
        %v1629 = vsel %vm1611, %v1596, %v844
        %v1630 = vsel %vm1611, %v1597, %v846
        %v1631 = vsel %vm1611, %v1598, %v848
        %v1632 = vsel %vm1611, %v1599, %v850
        %v1633 = vsel %vm1611, %v1600, %v852
        %v1634 = vsel %vm1611, %v1601, %v854
        %v1635 = vsel %vm1611, %v1602, %v856
        %v1636 = vsel %vm1611, %v1603, %v858
        %v1637 = vsel %vm1611, %v1604, %v860
        %v1638 = vsel %vm1611, %v1605, %v862
        %v1639 = vsel %vm1611, %v1606, %v864
        %v1640 = vsel %vm1611, %v1607, %v866
        %v1641 = vsel %vm1611, %v1608, %v868
        %v1642 = vsel %vm1611, %v1609, %v870
        %v1643 = vsel %vm1611, %v1610, %v872
        %vm1644 = vcmask 130048
        %v1645 = vsel %vm1644, %v1612, %v938
        %v1646 = vsel %vm1644, %v1613, %v940
        %v1647 = vsel %vm1644, %v1614, %v942
        %v1648 = vsel %vm1644, %v1615, %v944
        %v1649 = vsel %vm1644, %v1616, %v946
        %v1650 = vsel %vm1644, %v1617, %v948
        %v1651 = vsel %vm1644, %v1618, %v950
        %v1652 = vsel %vm1644, %v1619, %v952
        %v1653 = vsel %vm1644, %v1620, %v954
        %v1654 = vsel %vm1644, %v1621, %v956
        %v1655 = vsel %vm1644, %v1622, %v958
        %v1656 = vsel %vm1644, %v1623, %v960
        %v1657 = vsel %vm1644, %v1624, %v962
        %v1658 = vsel %vm1644, %v1625, %v964
        %v1659 = vsel %vm1644, %v1626, %v966
        %v1660 = vsel %vm1644, %v1627, %v968
        %v1661 = vsel %vm1644, %v1628, %v970
        %v1662 = vsel %vm1644, %v1629, %v972
        %v1663 = vsel %vm1644, %v1630, %v974
        %v1664 = vsel %vm1644, %v1631, %v976
        %v1665 = vsel %vm1644, %v1632, %v978
        %v1666 = vsel %vm1644, %v1633, %v980
        %v1667 = vsel %vm1644, %v1634, %v982
        %v1668 = vsel %vm1644, %v1635, %v984
        %v1669 = vsel %vm1644, %v1636, %v986
        %v1670 = vsel %vm1644, %v1637, %v988
        %v1671 = vsel %vm1644, %v1638, %v990
        %v1672 = vsel %vm1644, %v1639, %v992
        %v1673 = vsel %vm1644, %v1640, %v994
        %v1674 = vsel %vm1644, %v1641, %v996
        %v1675 = vsel %vm1644, %v1642, %v998
        %v1676 = vsel %vm1644, %v1643, %v1000
        %vm1677 = vcmask 162816
        %v1678 = vsel %vm1677, %v1645, %v1066
        %v1679 = vsel %vm1677, %v1646, %v1068
        %v1680 = vsel %vm1677, %v1647, %v1070
        %v1681 = vsel %vm1677, %v1648, %v1072
        %v1682 = vsel %vm1677, %v1649, %v1074
        %v1683 = vsel %vm1677, %v1650, %v1076
        %v1684 = vsel %vm1677, %v1651, %v1078
        %v1685 = vsel %vm1677, %v1652, %v1080
        %v1686 = vsel %vm1677, %v1653, %v1082
        %v1687 = vsel %vm1677, %v1654, %v1084
        %v1688 = vsel %vm1677, %v1655, %v1086
        %v1689 = vsel %vm1677, %v1656, %v1088
        %v1690 = vsel %vm1677, %v1657, %v1090
        %v1691 = vsel %vm1677, %v1658, %v1092
        %v1692 = vsel %vm1677, %v1659, %v1094
        %v1693 = vsel %vm1677, %v1660, %v1096
        %v1694 = vsel %vm1677, %v1661, %v1098
        %v1695 = vsel %vm1677, %v1662, %v1100
        %v1696 = vsel %vm1677, %v1663, %v1102
        %v1697 = vsel %vm1677, %v1664, %v1104
        %v1698 = vsel %vm1677, %v1665, %v1106
        %v1699 = vsel %vm1677, %v1666, %v1108
        %v1700 = vsel %vm1677, %v1667, %v1110
        %v1701 = vsel %vm1677, %v1668, %v1112
        %v1702 = vsel %vm1677, %v1669, %v1114
        %v1703 = vsel %vm1677, %v1670, %v1116
        %v1704 = vsel %vm1677, %v1671, %v1118
        %v1705 = vsel %vm1677, %v1672, %v1120
        %v1706 = vsel %vm1677, %v1673, %v1122
        %v1707 = vsel %vm1677, %v1674, %v1124
        %v1708 = vsel %vm1677, %v1675, %v1126
        %v1709 = vsel %vm1677, %v1676, %v1128
        %vm1710 = vcmask 195584
        %v1711 = vsel %vm1710, %v1678, %v1194
        %v1712 = vsel %vm1710, %v1679, %v1196
        %v1713 = vsel %vm1710, %v1680, %v1198
        %v1714 = vsel %vm1710, %v1681, %v1200
        %v1715 = vsel %vm1710, %v1682, %v1202
        %v1716 = vsel %vm1710, %v1683, %v1204
        %v1717 = vsel %vm1710, %v1684, %v1206
        %v1718 = vsel %vm1710, %v1685, %v1208
        %v1719 = vsel %vm1710, %v1686, %v1210
        %v1720 = vsel %vm1710, %v1687, %v1212
        %v1721 = vsel %vm1710, %v1688, %v1214
        %v1722 = vsel %vm1710, %v1689, %v1216
        %v1723 = vsel %vm1710, %v1690, %v1218
        %v1724 = vsel %vm1710, %v1691, %v1220
        %v1725 = vsel %vm1710, %v1692, %v1222
        %v1726 = vsel %vm1710, %v1693, %v1224
        %v1727 = vsel %vm1710, %v1694, %v1226
        %v1728 = vsel %vm1710, %v1695, %v1228
        %v1729 = vsel %vm1710, %v1696, %v1230
        %v1730 = vsel %vm1710, %v1697, %v1232
        %v1731 = vsel %vm1710, %v1698, %v1234
        %v1732 = vsel %vm1710, %v1699, %v1236
        %v1733 = vsel %vm1710, %v1700, %v1238
        %v1734 = vsel %vm1710, %v1701, %v1240
        %v1735 = vsel %vm1710, %v1702, %v1242
        %v1736 = vsel %vm1710, %v1703, %v1244
        %v1737 = vsel %vm1710, %v1704, %v1246
        %v1738 = vsel %vm1710, %v1705, %v1248
        %v1739 = vsel %vm1710, %v1706, %v1250
        %v1740 = vsel %vm1710, %v1707, %v1252
        %v1741 = vsel %vm1710, %v1708, %v1254
        %v1742 = vsel %vm1710, %v1709, %v1256
        %vm1743 = vcmask 228352
        %v1744 = vsel %vm1743, %v1711, %v1322
        %v1745 = vsel %vm1743, %v1712, %v1324
        %v1746 = vsel %vm1743, %v1713, %v1326
        %v1747 = vsel %vm1743, %v1714, %v1328
        %v1748 = vsel %vm1743, %v1715, %v1330
        %v1749 = vsel %vm1743, %v1716, %v1332
        %v1750 = vsel %vm1743, %v1717, %v1334
        %v1751 = vsel %vm1743, %v1718, %v1336
        %v1752 = vsel %vm1743, %v1719, %v1338
        %v1753 = vsel %vm1743, %v1720, %v1340
        %v1754 = vsel %vm1743, %v1721, %v1342
        %v1755 = vsel %vm1743, %v1722, %v1344
        %v1756 = vsel %vm1743, %v1723, %v1346
        %v1757 = vsel %vm1743, %v1724, %v1348
        %v1758 = vsel %vm1743, %v1725, %v1350
        %v1759 = vsel %vm1743, %v1726, %v1352
        %v1760 = vsel %vm1743, %v1727, %v1354
        %v1761 = vsel %vm1743, %v1728, %v1356
        %v1762 = vsel %vm1743, %v1729, %v1358
        %v1763 = vsel %vm1743, %v1730, %v1360
        %v1764 = vsel %vm1743, %v1731, %v1362
        %v1765 = vsel %vm1743, %v1732, %v1364
        %v1766 = vsel %vm1743, %v1733, %v1366
        %v1767 = vsel %vm1743, %v1734, %v1368
        %v1768 = vsel %vm1743, %v1735, %v1370
        %v1769 = vsel %vm1743, %v1736, %v1372
        %v1770 = vsel %vm1743, %v1737, %v1374
        %v1771 = vsel %vm1743, %v1738, %v1376
        %v1772 = vsel %vm1743, %v1739, %v1378
        %v1773 = vsel %vm1743, %v1740, %v1380
        %v1774 = vsel %vm1743, %v1741, %v1382
        %v1775 = vsel %vm1743, %v1742, %v1384
        %vm1776 = vcmask 261120
        %v1777 = vsel %vm1776, %v1744, %v1450
        %v1778 = vsel %vm1776, %v1745, %v1452
        %v1779 = vsel %vm1776, %v1746, %v1454
        %v1780 = vsel %vm1776, %v1747, %v1456
        %v1781 = vsel %vm1776, %v1748, %v1458
        %v1782 = vsel %vm1776, %v1749, %v1460
        %v1783 = vsel %vm1776, %v1750, %v1462
        %v1784 = vsel %vm1776, %v1751, %v1464
        %v1785 = vsel %vm1776, %v1752, %v1466
        %v1786 = vsel %vm1776, %v1753, %v1468
        %v1787 = vsel %vm1776, %v1754, %v1470
        %v1788 = vsel %vm1776, %v1755, %v1472
        %v1789 = vsel %vm1776, %v1756, %v1474
        %v1790 = vsel %vm1776, %v1757, %v1476
        %v1791 = vsel %vm1776, %v1758, %v1478
        %v1792 = vsel %vm1776, %v1759, %v1480
        %v1793 = vsel %vm1776, %v1760, %v1482
        %v1794 = vsel %vm1776, %v1761, %v1484
        %v1795 = vsel %vm1776, %v1762, %v1486
        %v1796 = vsel %vm1776, %v1763, %v1488
        %v1797 = vsel %vm1776, %v1764, %v1490
        %v1798 = vsel %vm1776, %v1765, %v1492
        %v1799 = vsel %vm1776, %v1766, %v1494
        %v1800 = vsel %vm1776, %v1767, %v1496
        %v1801 = vsel %vm1776, %v1768, %v1498
        %v1802 = vsel %vm1776, %v1769, %v1500
        %v1803 = vsel %vm1776, %v1770, %v1502
        %v1804 = vsel %vm1776, %v1771, %v1504
        %v1805 = vsel %vm1776, %v1772, %v1506
        %v1806 = vsel %vm1776, %v1773, %v1508
        %v1807 = vsel %vm1776, %v1774, %v1510
        %v1808 = vsel %vm1776, %v1775, %v1512
        %v1809 = vld [vmem:[%s219] sm:$0xff]
        %v1810 = vld [vmem:[%s219 + $0x8] sm:$0xff]
        %v1811 = vld [vmem:[%s219 + $0x10] sm:$0xff]
        %v1812 = vld [vmem:[%s219 + $0x18] sm:$0xff]
        %v1813 = vld [vmem:[%s219 + $0x20] sm:$0xf]
        %v1814 = vld [vmem:[%s222] sm:$0x1]
        %v1816 = vlaneseq
        %v1817 = vshrl.u32 %v1816, 7
        %v1818 = vsub.s32 0, %v1817
        %v1819 = vrot.slane %v1814, %v1818
        %vm1821 = vcmask 293888
        %v1823 = vsel %vm1821, %v1777, 0
        %v1826 = vsel %vm1821, %v1778, 0
        %v1829 = vsel %vm1821, %v1779, 0
        %v1832 = vsel %vm1821, %v1780, 0
        %v1835 = vsel %vm1821, %v1781, 0
        %v1838 = vsel %vm1821, %v1782, 0
        %v1841 = vsel %vm1821, %v1783, 0
        %v1844 = vsel %vm1821, %v1784, 0
        %v1847 = vsel %vm1821, %v1785, 0
        %v1850 = vsel %vm1821, %v1786, 0
        %v1853 = vsel %vm1821, %v1787, 0
        %v1856 = vsel %vm1821, %v1788, 0
        %v1859 = vsel %vm1821, %v1789, 0
        %v1862 = vsel %vm1821, %v1790, 0
        %v1865 = vsel %vm1821, %v1791, 0
        %v1868 = vsel %vm1821, %v1792, 0
        %v1871 = vsel %vm1821, %v1793, 0
        %v1874 = vsel %vm1821, %v1794, 0
        %v1877 = vsel %vm1821, %v1795, 0
        %v1880 = vsel %vm1821, %v1796, 0
        %v1883 = vsel %vm1821, %v1797, 0
        %v1886 = vsel %vm1821, %v1798, 0
        %v1889 = vsel %vm1821, %v1799, 0
        %v1892 = vsel %vm1821, %v1800, 0
        %v1895 = vsel %vm1821, %v1801, 0
        %v1898 = vsel %vm1821, %v1802, 0
        %v1901 = vsel %vm1821, %v1803, 0
        %v1904 = vsel %vm1821, %v1804, 0
        %v1907 = vsel %vm1821, %v1805, 0
        %v1910 = vsel %vm1821, %v1806, 0
        %v1913 = vsel %vm1821, %v1807, 0
        %v1916 = vsel %vm1821, %v1808, 0
        %vm1918 = vcmask 1043456
        %v1920 = vsel %vm1918, %v1813, 0
        %1922 = vmatprep.subr.mxu0 0.0
        %1923 = vmatpush1.msra.mxu0 0.0
        %1924 = vmatprep.subr.mxu0 0.0
        %1925 = vmatpush1.msra.mxu0 0.0
        %1926 = vmatprep.subr.mxu0 0.0
        %1927 = vmatpush1.msra.mxu0 0.0
        %1928 = vmatprep.subr.mxu0 0.0
        %1929 = vmatpush1.msra.mxu0 0.0
        %1930 = vmatprep.subr.mxu0 0.0
        %1931 = vmatpush1.msra.mxu0 0.0
        %1932 = vmatprep.subr.mxu0 0.0
        %1933 = vmatpush1.msra.mxu0 0.0
        %1934 = vmatprep.subr.mxu0 0.0
        %1935 = vmatpush1.msra.mxu0 0.0
        %1936 = vmatprep.subr.mxu0 0.0
        %1937 = vmatpush1.msra.mxu0 0.0
        %1938 = vmatprep.subr.mxu0 0.0
        %1939 = vmatpush1.msra.mxu0 0.0
        %1940 = vmatprep.subr.mxu0 0.0
        %1941 = vmatpush1.msra.mxu0 0.0
        %1942 = vmatprep.subr.mxu0 0.0
        %1943 = vmatpush1.msra.mxu0 0.0
        %1944 = vmatprep.subr.mxu0 0.0
        %1945 = vmatpush1.msra.mxu0 %v1920
        %1946 = vmatprep.subr.mxu0 0.0
        %1947 = vmatpush1.msra.mxu0 %v1812
        %1948 = vmatprep.subr.mxu0 0.0
        %1949 = vmatpush1.msra.mxu0 %v1811
        %1950 = vmatprep.subr.mxu0 0.0
        %1951 = vmatpush1.msra.mxu0 %v1810
        %1952 = vmatprep.subr.mxu0 0.0
        %1953 = vmatpush1.msra.mxu0 %v1809
        %1954 = vmatprep.subr.mxu0 0.0
        %1955 = vmatpush2.msra.mxu0 0.0
        %1956 = vmatprep.subr.mxu0 0.0
        %1957 = vmatpush2.msra.mxu0 0.0
        %1958 = vmatprep.subr.mxu0 0.0
        %1959 = vmatpush2.msra.mxu0 0.0
        %1960 = vmatprep.subr.mxu0 0.0
        %1961 = vmatpush2.msra.mxu0 0.0
        %1962 = vmatprep.subr.mxu0 0.0
        %1963 = vmatpush2.msra.mxu0 0.0
        %1964 = vmatprep.subr.mxu0 0.0
        %1965 = vmatpush2.msra.mxu0 0.0
        %1966 = vmatprep.subr.mxu0 0.0
        %1967 = vmatpush2.msra.mxu0 0.0
        %1968 = vmatprep.subr.mxu0 0.0
        %1969 = vmatpush2.msra.mxu0 0.0
        %1970 = vmatprep.subr.mxu0 0.0
        %1971 = vmatpush2.msra.mxu0 0.0
        %1972 = vmatprep.subr.mxu0 0.0
        %1973 = vmatpush2.msra.mxu0 0.0
        %1974 = vmatprep.subr.mxu0 0.0
        %1975 = vmatpush2.msra.mxu0 0.0
        %1976 = vmatprep.subr.mxu0 0.0
        %1977 = vmatpush2.msra.mxu0 0.0
        %1978 = vmatprep.subr.mxu0 0.0
        %1979 = vmatpush2.msra.mxu0 0.0
        %1980 = vmatprep.subr.mxu0 0.0
        %1981 = vmatpush2.msra.mxu0 0.0
        %1982 = vmatprep.subr.mxu0 0.0
        %1983 = vmatpush2.msra.mxu0 0.0
        %1984 = vmatprep.subr.mxu0 0.0
        %1985 = vmatpush2.msra.mxu0 0.0
        %1986 = vmatprep.mubr.f32.mxu0 0.0
        %1987 = vmatmul.mubr.f32.gmra.mxu0 %v1823
        %v1988 = vpop.f32.mrf.mxu0
        %v1989 = vadd.f32 %v1819, %v1988
        %v1990 = vpop.f32.mrf.mxu0
        %1991 = vmatprep.mubr.f32.mxu0 0.0
        %1992 = vmatmul.mubr.f32.gmra.mxu0 %v1826
        %v1993 = vpop.f32.mrf.mxu0
        %v1994 = vadd.f32 %v1819, %v1993
        %v1995 = vpop.f32.mrf.mxu0
        %1996 = vmatprep.mubr.f32.mxu0 0.0
        %1997 = vmatmul.mubr.f32.gmra.mxu0 %v1829
        %v1998 = vpop.f32.mrf.mxu0
        %v1999 = vadd.f32 %v1819, %v1998
        %v2000 = vpop.f32.mrf.mxu0
        %2001 = vmatprep.mubr.f32.mxu0 0.0
        %2002 = vmatmul.mubr.f32.gmra.mxu0 %v1832
        %v2003 = vpop.f32.mrf.mxu0
        %v2004 = vadd.f32 %v1819, %v2003
        %v2005 = vpop.f32.mrf.mxu0
        %2006 = vmatprep.mubr.f32.mxu0 0.0
        %2007 = vmatmul.mubr.f32.gmra.mxu0 %v1835
        %v2008 = vpop.f32.mrf.mxu0
        %v2009 = vadd.f32 %v1819, %v2008
        %v2010 = vpop.f32.mrf.mxu0
        %2011 = vmatprep.mubr.f32.mxu0 0.0
        %2012 = vmatmul.mubr.f32.gmra.mxu0 %v1838
        %v2013 = vpop.f32.mrf.mxu0
        %v2014 = vadd.f32 %v1819, %v2013
        %v2015 = vpop.f32.mrf.mxu0
        %2016 = vmatprep.mubr.f32.mxu0 0.0
        %2017 = vmatmul.mubr.f32.gmra.mxu0 %v1841
        %v2018 = vpop.f32.mrf.mxu0
        %v2019 = vadd.f32 %v1819, %v2018
        %v2020 = vpop.f32.mrf.mxu0
        %2021 = vmatprep.mubr.f32.mxu0 0.0
        %2022 = vmatmul.mubr.f32.gmra.mxu0 %v1844
        %v2023 = vpop.f32.mrf.mxu0
        %v2024 = vadd.f32 %v1819, %v2023
        %v2025 = vpop.f32.mrf.mxu0
        %2026 = vmatprep.mubr.f32.mxu0 0.0
        %2027 = vmatmul.mubr.f32.gmra.mxu0 %v1847
        %v2028 = vpop.f32.mrf.mxu0
        %v2029 = vadd.f32 %v1819, %v2028
        %v2030 = vpop.f32.mrf.mxu0
        %2031 = vmatprep.mubr.f32.mxu0 0.0
        %2032 = vmatmul.mubr.f32.gmra.mxu0 %v1850
        %v2033 = vpop.f32.mrf.mxu0
        %v2034 = vadd.f32 %v1819, %v2033
        %v2035 = vpop.f32.mrf.mxu0
        %2036 = vmatprep.mubr.f32.mxu0 0.0
        %2037 = vmatmul.mubr.f32.gmra.mxu0 %v1853
        %v2038 = vpop.f32.mrf.mxu0
        %v2039 = vadd.f32 %v1819, %v2038
        %v2040 = vpop.f32.mrf.mxu0
        %2041 = vmatprep.mubr.f32.mxu0 0.0
        %2042 = vmatmul.mubr.f32.gmra.mxu0 %v1856
        %v2043 = vpop.f32.mrf.mxu0
        %v2044 = vadd.f32 %v1819, %v2043
        %v2045 = vpop.f32.mrf.mxu0
        %2046 = vmatprep.mubr.f32.mxu0 0.0
        %2047 = vmatmul.mubr.f32.gmra.mxu0 %v1859
        %v2048 = vpop.f32.mrf.mxu0
        %v2049 = vadd.f32 %v1819, %v2048
        %v2050 = vpop.f32.mrf.mxu0
        %2051 = vmatprep.mubr.f32.mxu0 0.0
        %2052 = vmatmul.mubr.f32.gmra.mxu0 %v1862
        %v2053 = vpop.f32.mrf.mxu0
        %v2054 = vadd.f32 %v1819, %v2053
        %v2055 = vpop.f32.mrf.mxu0
        %2056 = vmatprep.mubr.f32.mxu0 0.0
        %2057 = vmatmul.mubr.f32.gmra.mxu0 %v1865
        %v2058 = vpop.f32.mrf.mxu0
        %v2059 = vadd.f32 %v1819, %v2058
        %v2060 = vpop.f32.mrf.mxu0
        %2061 = vmatprep.mubr.f32.mxu0 0.0
        %2062 = vmatmul.mubr.f32.gmra.mxu0 %v1868
        %v2063 = vpop.f32.mrf.mxu0
        %v2064 = vadd.f32 %v1819, %v2063
        %v2065 = vpop.f32.mrf.mxu0
        %2066 = vmatprep.mubr.f32.mxu0 0.0
        %2067 = vmatmul.mubr.f32.gmra.mxu0 %v1871
        %v2068 = vpop.f32.mrf.mxu0
        %v2069 = vadd.f32 %v1819, %v2068
        %v2070 = vpop.f32.mrf.mxu0
        %2071 = vmatprep.mubr.f32.mxu0 0.0
        %2072 = vmatmul.mubr.f32.gmra.mxu0 %v1874
        %v2073 = vpop.f32.mrf.mxu0
        %v2074 = vadd.f32 %v1819, %v2073
        %v2075 = vpop.f32.mrf.mxu0
        %2076 = vmatprep.mubr.f32.mxu0 0.0
        %2077 = vmatmul.mubr.f32.gmra.mxu0 %v1877
        %v2078 = vpop.f32.mrf.mxu0
        %v2079 = vadd.f32 %v1819, %v2078
        %v2080 = vpop.f32.mrf.mxu0
        %2081 = vmatprep.mubr.f32.mxu0 0.0
        %2082 = vmatmul.mubr.f32.gmra.mxu0 %v1880
        %v2083 = vpop.f32.mrf.mxu0
        %v2084 = vadd.f32 %v1819, %v2083
        %v2085 = vpop.f32.mrf.mxu0
        %2086 = vmatprep.mubr.f32.mxu0 0.0
        %2087 = vmatmul.mubr.f32.gmra.mxu0 %v1883
        %v2088 = vpop.f32.mrf.mxu0
        %v2089 = vadd.f32 %v1819, %v2088
        %v2090 = vpop.f32.mrf.mxu0
        %2091 = vmatprep.mubr.f32.mxu0 0.0
        %2092 = vmatmul.mubr.f32.gmra.mxu0 %v1886
        %v2093 = vpop.f32.mrf.mxu0
        %v2094 = vadd.f32 %v1819, %v2093
        %v2095 = vpop.f32.mrf.mxu0
        %2096 = vmatprep.mubr.f32.mxu0 0.0
        %2097 = vmatmul.mubr.f32.gmra.mxu0 %v1889
        %v2098 = vpop.f32.mrf.mxu0
        %v2099 = vadd.f32 %v1819, %v2098
        %v2100 = vpop.f32.mrf.mxu0
        %2101 = vmatprep.mubr.f32.mxu0 0.0
        %2102 = vmatmul.mubr.f32.gmra.mxu0 %v1892
        %v2103 = vpop.f32.mrf.mxu0
        %v2104 = vadd.f32 %v1819, %v2103
        %v2105 = vpop.f32.mrf.mxu0
        %2106 = vmatprep.mubr.f32.mxu0 0.0
        %2107 = vmatmul.mubr.f32.gmra.mxu0 %v1895
        %v2108 = vpop.f32.mrf.mxu0
        %v2109 = vadd.f32 %v1819, %v2108
        %v2110 = vpop.f32.mrf.mxu0
        %2111 = vmatprep.mubr.f32.mxu0 0.0
        %2112 = vmatmul.mubr.f32.gmra.mxu0 %v1898
        %v2113 = vpop.f32.mrf.mxu0
        %v2114 = vadd.f32 %v1819, %v2113
        %v2115 = vpop.f32.mrf.mxu0
        %2116 = vmatprep.mubr.f32.mxu0 0.0
        %2117 = vmatmul.mubr.f32.gmra.mxu0 %v1901
        %v2118 = vpop.f32.mrf.mxu0
        %v2119 = vadd.f32 %v1819, %v2118
        %v2120 = vpop.f32.mrf.mxu0
        %2121 = vmatprep.mubr.f32.mxu0 0.0
        %2122 = vmatmul.mubr.f32.gmra.mxu0 %v1904
        %v2123 = vpop.f32.mrf.mxu0
        %v2124 = vadd.f32 %v1819, %v2123
        %v2125 = vpop.f32.mrf.mxu0
        %2126 = vmatprep.mubr.f32.mxu0 0.0
        %2127 = vmatmul.mubr.f32.gmra.mxu0 %v1907
        %v2128 = vpop.f32.mrf.mxu0
        %v2129 = vadd.f32 %v1819, %v2128
        %v2130 = vpop.f32.mrf.mxu0
        %2131 = vmatprep.mubr.f32.mxu0 0.0
        %2132 = vmatmul.mubr.f32.gmra.mxu0 %v1910
        %v2133 = vpop.f32.mrf.mxu0
        %v2134 = vadd.f32 %v1819, %v2133
        %v2135 = vpop.f32.mrf.mxu0
        %2136 = vmatprep.mubr.f32.mxu0 0.0
        %2137 = vmatmul.mubr.f32.gmra.mxu0 %v1913
        %v2138 = vpop.f32.mrf.mxu0
        %v2139 = vadd.f32 %v1819, %v2138
        %v2140 = vpop.f32.mrf.mxu0
        %2141 = vmatprep.mubr.f32.mxu0 0.0
        %2142 = vmatmul.mubr.f32.gmra.mxu0 %v1916
        %v2143 = vpop.f32.mrf.mxu0
        %v2144 = vadd.f32 %v1819, %v2143
        %v2145 = vpop.f32.mrf.mxu0
        %2146 = vdwg.mxu0
        %2147 = vst [vmem:[%s210] sm:$0xff] %v1989
        %2148 = vst [vmem:[%s210 + $0x8] sm:$0xff] %v1994
        %2149 = vst [vmem:[%s210 + $0x10] sm:$0xff] %v1999
        %2150 = vst [vmem:[%s210 + $0x18] sm:$0xff] %v2004
        %2151 = vst [vmem:[%s210 + $0x20] sm:$0xff] %v2009
        %2152 = vst [vmem:[%s210 + $0x28] sm:$0xff] %v2014
        %2153 = vst [vmem:[%s210 + $0x30] sm:$0xff] %v2019
        %2154 = vst [vmem:[%s210 + $0x38] sm:$0xff] %v2024
        %2155 = vst [vmem:[%s210 + $0x40] sm:$0xff] %v2029
        %2156 = vst [vmem:[%s210 + $0x48] sm:$0xff] %v2034
        %2157 = vst [vmem:[%s210 + $0x50] sm:$0xff] %v2039
        %2158 = vst [vmem:[%s210 + $0x58] sm:$0xff] %v2044
        %2159 = vst [vmem:[%s210 + $0x60] sm:$0xff] %v2049
        %2160 = vst [vmem:[%s210 + $0x68] sm:$0xff] %v2054
        %2161 = vst [vmem:[%s210 + $0x70] sm:$0xff] %v2059
        %2162 = vst [vmem:[%s210 + $0x78] sm:$0xff] %v2064
        %2163 = vst [vmem:[%s210 + $0x80] sm:$0xff] %v2069
        %2164 = vst [vmem:[%s210 + $0x88] sm:$0xff] %v2074
        %2165 = vst [vmem:[%s210 + $0x90] sm:$0xff] %v2079
        %2166 = vst [vmem:[%s210 + $0x98] sm:$0xff] %v2084
        %2167 = vst [vmem:[%s210 + $0xa0] sm:$0xff] %v2089
        %2168 = vst [vmem:[%s210 + $0xa8] sm:$0xff] %v2094
        %2169 = vst [vmem:[%s210 + $0xb0] sm:$0xff] %v2099
        %2170 = vst [vmem:[%s210 + $0xb8] sm:$0xff] %v2104
        %2171 = vst [vmem:[%s210 + $0xc0] sm:$0xff] %v2109
        %2172 = vst [vmem:[%s210 + $0xc8] sm:$0xff] %v2114
        %2173 = vst [vmem:[%s210 + $0xd0] sm:$0xff] %v2119
        %2174 = vst [vmem:[%s210 + $0xd8] sm:$0xff] %v2124
        %2175 = vst [vmem:[%s210 + $0xe0] sm:$0xff] %v2129
        %2176 = vst [vmem:[%s210 + $0xe8] sm:$0xff] %v2134
        %2177 = vst [vmem:[%s210 + $0xf0] sm:$0xff] %v2139
        %2178 = vst [vmem:[%s210 + $0xf8] sm:$0xff] %v2144
        %s2179 = sand.u32 %s126, 1
        %s2180 = scalar_lea.sflag [#allocation3], %s2179
        %s2181 = sand.u32 %s126, 1
        %s2182 = smul.addr %s2181, 256
        %s2183 = scalar_lea.vmem [#allocation2], %s2182
        // Predicated region
        $region33: #{tpu_custom_call.1} parent=31 // pred_check
          %p2184 = pneg %p136
        $region34: #{tpu_custom_call.1} parent=31 // pred_check_branch
          %2186 = sbr.rel (%p2184) target = $region36
        $region35: #{tpu_custom_call.1} parent=31 // pred_region
          %s2187 = smul.u32 16, %s24
          %s2189 = ssub.s32 4096, 4096
          %2190 = vsyncadd %s2180, %s2189
          %s2191 = smul.addr %s2187, 2
          %s2192 = sadd.s32 %s23, %s2191
          %s2193 = smul.addr %s22, 32
          %s2194 = sadd.s32 %s2192, %s2193
          %s2195 = smul.addr %s2194, 128
          %s2196 = scalar_lea.hbm %s3, %s2195
          %s2197 = sshll.u32 %s2183, 4
          %s2198 = int_to_ptr.vmem [resolvable:$true] %s2197
          %2203 = dma.vmem_to_hbm [thread:$0]  %s2198, 4096, %s2196, %s2180, 128, 128, 8
        $region36: #{tpu_custom_call.1} parent=31 // pred_fallthru
          _
      $region32: #{tpu_custom_call.1} parent=5 // pred_fallthru
        _
      %p2204 = scmp.le.s32.totalorder 2, %s12
      // Predicated region
      $region37: #{tpu_custom_call.1} parent=5 // pred_check
        %p2205 = pneg %p2204
      $region38: #{tpu_custom_call.1} parent=5 // pred_check_branch
        %2207 = sbr.rel (%p2205) target = $region40
      $region39: #{tpu_custom_call.1} parent=5 // pred_region
        %s2208 = ssub.s32 %s12, 2
        // Predicated region
        $region41: #{tpu_custom_call.1} parent=39 // pred_check
          %p2209 = pneg %p142
        $region42: #{tpu_custom_call.1} parent=39 // pred_check_branch
          %2211 = sbr.rel (%p2209) target = $region44
        $region43: #{tpu_custom_call.1} parent=39 // pred_region
          %s2212 = sand.u32 %s127, 1
          %s2213 = scalar_lea.sflag [#allocation3], %s2212
          %s2214 = sand.u32 %s127, 1
          %s2215 = smul.addr %s2214, 256
          %s2216 = scalar_lea.vmem [#allocation2], %s2215
          %2217 = dma.done %s2213, 4096
        $region44: #{tpu_custom_call.1} parent=39 // pred_fallthru
          _
      $region40: #{tpu_custom_call.1} parent=5 // pred_fallthru
        _
    $region6: #{tpu_custom_call.1} parent=1 // loop_footer
      %s16 = sadd.s32 1, %s12
    $region7: #{tpu_custom_call.1} parent=1 // loop_footer_branch
      %11 = sbr.rel target = $region3
    $region8: #{tpu_custom_call.1} parent=1 // loop_exit
      _
    %2218 = vsyncpa [#allocation3], 1
    %s2219 = scalar_lea.sflag [#allocation3], 1
    %2220 = vsyncpa %s2219, 1

</llo_original>
